<compile_context>
chip_gen: v7x
topology: tpu7x:2x2x1
jax: 0.10.0
libtpu: 0.0.40
codegen_flags: <defaults>
</compile_context>

<pallas_src>
import functools

import jax
import jax.numpy as jnp
from jax import lax
from jax.experimental import pallas as pl
from jax.experimental.pallas import tpu as pltpu


def _round_up(x, m):
    return ((x + m - 1) // m) * m


# ---------------------------------------------------------------------------
# Pallas kernel 1: matmul with fused (BN-folded) bias + ReLU  (the conv path)
#   A:(M,K) bf16  @  B:(K,N) bf16  ->  f32 accumulate  -> +bias, ReLU -> bf16
#   Grid runs over M only; K and N are full blocks (no padding, no K loop).
# ---------------------------------------------------------------------------
def _mm_bias_relu_kernel(a_ref, b_ref, bias_ref, o_ref):
    acc = jnp.dot(a_ref[...], b_ref[...], preferred_element_type=jnp.float32)
    o_ref[...] = jnp.maximum(acc + bias_ref[...], 0.0).astype(o_ref.dtype)


def _pick_tm(m):
    """M-tile: large tiles for the big-M layers, but keep >= 2 grid blocks when
    possible so the (parallel) M axis can be sharded across v7x's two cores."""
    if m >= 2048:
        return 512
    if m >= 512:
        return 256
    if m >= 256:
        return 128
    half = _round_up(max((m + 1) // 2, 8), 16)
    return min(half, _round_up(m, 8))


@functools.lru_cache(maxsize=None)
def _make_matmul(m, k, n, tm):
    grid_m = pl.cdiv(m, tm)
    f = pl.pallas_call(
        _mm_bias_relu_kernel,
        out_shape=jax.ShapeDtypeStruct((m, n), jnp.bfloat16),
        grid_spec=pltpu.PrefetchScalarGridSpec(
            num_scalar_prefetch=0,
            grid=(grid_m,),
            in_specs=[
                pl.BlockSpec((tm, k), lambda i: (i, 0)),   # A: stream M tiles
                pl.BlockSpec((k, n), lambda i: (0, 0)),    # B: resident (full)
                pl.BlockSpec((1, n), lambda i: (0, 0)),    # bias: resident
            ],
            out_specs=pl.BlockSpec((tm, n), lambda i: (i, 0)),
        ),
        compiler_params=pltpu.CompilerParams(
            dimension_semantics=("parallel",)),
    )
    return jax.jit(f)


def matmul_bias_relu(a, b, bias):
    """relu(a @ b + bias): a (M,K), b (K,N), bias (N,) -> (M,N) bfloat16."""
    m, k = a.shape
    _, n = b.shape
    tm = _pick_tm(m)
    fn = _make_matmul(m, k, n, tm)
    return fn(a.astype(jnp.bfloat16), b.astype(jnp.bfloat16),
              bias.astype(jnp.float32).reshape(1, n))


# ---------------------------------------------------------------------------
# Pallas kernel 2: adaptive_avg_pool2d((1,1))  -- lane-dense NHWC layout
#   input (N, H*W, C=2048): reduce the spatial (sublane) axis, channels on lanes
# ---------------------------------------------------------------------------
def _gap_kernel(x_ref, o_ref):
    o_ref[0] = jnp.mean(x_ref[0].astype(jnp.float32), axis=0, keepdims=True)


def global_avg_pool(x):
    n, h, w, c = x.shape
    xr = x.reshape(n, h * w, c)
    out = pl.pallas_call(
        _gap_kernel,
        out_shape=jax.ShapeDtypeStruct((n, 1, c), jnp.float32),
        grid_spec=pltpu.PrefetchScalarGridSpec(
            num_scalar_prefetch=0,
            grid=(n,),
            in_specs=[pl.BlockSpec((1, h * w, c), lambda i: (i, 0, 0))],
            out_specs=pl.BlockSpec((1, 1, c), lambda i: (i, 0, 0)),
        ),
        compiler_params=pltpu.CompilerParams(
            dimension_semantics=("parallel",)),
    )(xr)
    return out.reshape(n, c)


# ---------------------------------------------------------------------------
# Plain-JAX glue: NHWC patch extraction and pooling
# ---------------------------------------------------------------------------
def _extract_patches_nhwc(x, kh, kw, sh, sw, ph, pw):
    """im2col in NHWC. 1x1/stride-1 is a pure (zero-copy) reshape; kxk concats
    the kh*kw shifted views along the channel axis (no transpose needed)."""
    n, h, w, c = x.shape
    if ph or pw:
        x = jnp.pad(x, ((0, 0), (ph, ph), (pw, pw), (0, 0)))
    hp, wp = h + 2 * ph, w + 2 * pw
    ho = (hp - kh) // sh + 1
    wo = (wp - kw) // sw + 1
    if kh == 1 and kw == 1 and sh == 1 and sw == 1:
        return x.reshape(n * ho * wo, c), ho, wo
    cols = [x[:, i:i + sh * (ho - 1) + 1:sh, j:j + sw * (wo - 1) + 1:sw, :]
            for i in range(kh) for j in range(kw)]
    a = jnp.concatenate(cols, axis=-1)            # (N, Ho, Wo, kh*kw*C)
    return a.reshape(n * ho * wo, kh * kw * c), ho, wo


def conv_bn_relu(x, p, stride=(1, 1), padding=(0, 0),
                 in_scale=None, in_shift=None):
    """BasicConv2d in NHWC: Conv2d(bias=False) + BatchNorm(eps=1e-3) + ReLU.

    BN (and optionally a per-input-channel affine x*in_scale + in_shift) is
    folded into the weights/bias; the conv itself is one Pallas matmul."""
    w = p["w"]                                    # (Cout, Cin, kh, kw) f32
    cout, cin, kh, kw = w.shape
    scale = p["gamma"] / jnp.sqrt(p["var"] + 1e-3)
    bias = p["beta"] - p["mean"] * scale
    if in_shift is not None:
        bias = bias + scale * jnp.einsum("ocij,c->o", w, in_shift)
    if in_scale is not None:
        w = w * in_scale[None, :, None, None]
    w = w * scale[:, None, None, None]
    # K ordering must match _extract_patches_nhwc: (kh, kw, cin)
    b_mat = w.transpose(2, 3, 1, 0).reshape(kh * kw * cin, cout)
    n = x.shape[0]
    a, ho, wo = _extract_patches_nhwc(x, kh, kw, stride[0], stride[1],
                                      padding[0], padding[1])
    y = matmul_bias_relu(a, b_mat, bias)          # (N*Ho*Wo, Cout) bf16
    return y.reshape(n, ho, wo, cout)


def max_pool_3x3_s2(x):
    return lax.reduce_window(x, jnp.array(-jnp.inf, x.dtype), lax.max,
                             (1, 3, 3, 1), (1, 2, 2, 1), "VALID")


def avg_pool_3x3_s1_p1(x):
    # count_include_pad=True (PyTorch default): always divide by 9.
    s = lax.reduce_window(x.astype(jnp.float32), jnp.array(0.0, jnp.float32),
                          lax.add, (1, 3, 3, 1), (1, 1, 1, 1),
                          ((0, 0), (1, 1), (1, 1), (0, 0)))
    return (s * (1.0 / 9.0)).astype(x.dtype)


# ---------------------------------------------------------------------------
# Inception v3 blocks (feature path only, up to Mixed_7c), NHWC
# ---------------------------------------------------------------------------
def inception_a(x, p):
    b1 = conv_bn_relu(x, p["branch1x1"])
    b5 = conv_bn_relu(x, p["branch5x5_1"])
    b5 = conv_bn_relu(b5, p["branch5x5_2"], padding=(2, 2))
    bd = conv_bn_relu(x, p["branch3x3dbl_1"])
    bd = conv_bn_relu(bd, p["branch3x3dbl_2"], padding=(1, 1))
    bd = conv_bn_relu(bd, p["branch3x3dbl_3"], padding=(1, 1))
    bp = conv_bn_relu(avg_pool_3x3_s1_p1(x), p["branch_pool"])
    return jnp.concatenate([b1, b5, bd, bp], axis=-1)


def inception_b(x, p):
    b3 = conv_bn_relu(x, p["branch3x3"], stride=(2, 2))
    bd = conv_bn_relu(x, p["branch3x3dbl_1"])
    bd = conv_bn_relu(bd, p["branch3x3dbl_2"], padding=(1, 1))
    bd = conv_bn_relu(bd, p["branch3x3dbl_3"], stride=(2, 2))
    bp = max_pool_3x3_s2(x)
    return jnp.concatenate([b3, bd, bp], axis=-1)


def inception_c(x, p):
    b1 = conv_bn_relu(x, p["branch1x1"])
    b7 = conv_bn_relu(x, p["branch7x7_1"])
    b7 = conv_bn_relu(b7, p["branch7x7_2"], padding=(0, 3))
    b7 = conv_bn_relu(b7, p["branch7x7_3"], padding=(3, 0))
    bd = conv_bn_relu(x, p["branch7x7dbl_1"])
    bd = conv_bn_relu(bd, p["branch7x7dbl_2"], padding=(3, 0))
    bd = conv_bn_relu(bd, p["branch7x7dbl_3"], padding=(0, 3))
    bd = conv_bn_relu(bd, p["branch7x7dbl_4"], padding=(3, 0))
    bd = conv_bn_relu(bd, p["branch7x7dbl_5"], padding=(0, 3))
    bp = conv_bn_relu(avg_pool_3x3_s1_p1(x), p["branch_pool"])
    return jnp.concatenate([b1, b7, bd, bp], axis=-1)


def inception_d(x, p):
    b3 = conv_bn_relu(x, p["branch3x3_1"])
    b3 = conv_bn_relu(b3, p["branch3x3_2"], stride=(2, 2))
    b7 = conv_bn_relu(x, p["branch7x7x3_1"])
    b7 = conv_bn_relu(b7, p["branch7x7x3_2"], padding=(0, 3))
    b7 = conv_bn_relu(b7, p["branch7x7x3_3"], padding=(3, 0))
    b7 = conv_bn_relu(b7, p["branch7x7x3_4"], stride=(2, 2))
    bp = max_pool_3x3_s2(x)
    return jnp.concatenate([b3, b7, bp], axis=-1)


def inception_e(x, p):
    b1 = conv_bn_relu(x, p["branch1x1"])
    b3 = conv_bn_relu(x, p["branch3x3_1"])
    b3 = jnp.concatenate([conv_bn_relu(b3, p["branch3x3_2a"], padding=(0, 1)),
                          conv_bn_relu(b3, p["branch3x3_2b"], padding=(1, 0))],
                         axis=-1)
    bd = conv_bn_relu(x, p["branch3x3dbl_1"])
    bd = conv_bn_relu(bd, p["branch3x3dbl_2"], padding=(1, 1))
    bd = jnp.concatenate([conv_bn_relu(bd, p["branch3x3dbl_3a"], padding=(0, 1)),
                          conv_bn_relu(bd, p["branch3x3dbl_3b"], padding=(1, 0))],
                         axis=-1)
    bp = conv_bn_relu(avg_pool_3x3_s1_p1(x), p["branch_pool"])
    return jnp.concatenate([b1, b3, bd, bp], axis=-1)


# ---------------------------------------------------------------------------
# Deterministic synthetic parameters (shapes match torchvision inception_v3)
# ---------------------------------------------------------------------------
class _ParamGen:
    def __init__(self, seed=0):
        self.key = jax.random.PRNGKey(seed)
        self.counter = 0

    def conv(self, cin, cout, kh, kw):
        self.counter += 1
        k = jax.random.fold_in(self.key, self.counter)
        fan_in = cin * kh * kw
        w = jax.random.normal(k, (cout, cin, kh, kw), jnp.float32) * \
            jnp.sqrt(2.0 / fan_in)
        return dict(w=w,
                    gamma=jnp.ones((cout,), jnp.float32),
                    beta=jnp.zeros((cout,), jnp.float32),
                    mean=jnp.zeros((cout,), jnp.float32),
                    var=jnp.ones((cout,), jnp.float32))


def init_params():
    g = _ParamGen(0)
    P = {
        "Conv2d_1a_3x3": g.conv(3, 32, 3, 3),
        "Conv2d_2a_3x3": g.conv(32, 32, 3, 3),
        "Conv2d_2b_3x3": g.conv(32, 64, 3, 3),
        "Conv2d_3b_1x1": g.conv(64, 80, 1, 1),
        "Conv2d_4a_3x3": g.conv(80, 192, 3, 3),
    }

    def block_a(cin, pool_features):
        return {
            "branch1x1": g.conv(cin, 64, 1, 1),
            "branch5x5_1": g.conv(cin, 48, 1, 1),
            "branch5x5_2": g.conv(48, 64, 5, 5),
            "branch3x3dbl_1": g.conv(cin, 64, 1, 1),
            "branch3x3dbl_2": g.conv(64, 96, 3, 3),
            "branch3x3dbl_3": g.conv(96, 96, 3, 3),
            "branch_pool": g.conv(cin, pool_features, 1, 1),
        }

    def block_b(cin):
        return {
            "branch3x3": g.conv(cin, 384, 3, 3),
            "branch3x3dbl_1": g.conv(cin, 64, 1, 1),
            "branch3x3dbl_2": g.conv(64, 96, 3, 3),
            "branch3x3dbl_3": g.conv(96, 96, 3, 3),
        }

    def block_c(cin, c7):
        return {
            "branch1x1": g.conv(cin, 192, 1, 1),
            "branch7x7_1": g.conv(cin, c7, 1, 1),
            "branch7x7_2": g.conv(c7, c7, 1, 7),
            "branch7x7_3": g.conv(c7, 192, 7, 1),
            "branch7x7dbl_1": g.conv(cin, c7, 1, 1),
            "branch7x7dbl_2": g.conv(c7, c7, 7, 1),
            "branch7x7dbl_3": g.conv(c7, c7, 1, 7),
            "branch7x7dbl_4": g.conv(c7, c7, 7, 1),
            "branch7x7dbl_5": g.conv(c7, 192, 1, 7),
            "branch_pool": g.conv(cin, 192, 1, 1),
        }

    def block_d(cin):
        return {
            "branch3x3_1": g.conv(cin, 192, 1, 1),
            "branch3x3_2": g.conv(192, 320, 3, 3),
            "branch7x7x3_1": g.conv(cin, 192, 1, 1),
            "branch7x7x3_2": g.conv(192, 192, 1, 7),
            "branch7x7x3_3": g.conv(192, 192, 7, 1),
            "branch7x7x3_4": g.conv(192, 192, 3, 3),
        }

    def block_e(cin):
        return {
            "branch1x1": g.conv(cin, 320, 1, 1),
            "branch3x3_1": g.conv(cin, 384, 1, 1),
            "branch3x3_2a": g.conv(384, 384, 1, 3),
            "branch3x3_2b": g.conv(384, 384, 3, 1),
            "branch3x3dbl_1": g.conv(cin, 448, 1, 1),
            "branch3x3dbl_2": g.conv(448, 384, 3, 3),
            "branch3x3dbl_3a": g.conv(384, 384, 1, 3),
            "branch3x3dbl_3b": g.conv(384, 384, 3, 1),
            "branch_pool": g.conv(cin, 192, 1, 1),
        }

    P["Mixed_5b"] = block_a(192, 32)
    P["Mixed_5c"] = block_a(256, 64)
    P["Mixed_5d"] = block_a(288, 64)
    P["Mixed_6a"] = block_b(288)
    P["Mixed_6b"] = block_c(768, 128)
    P["Mixed_6c"] = block_c(768, 160)
    P["Mixed_6d"] = block_c(768, 160)
    P["Mixed_6e"] = block_c(768, 192)
    P["Mixed_7a"] = block_d(768)
    P["Mixed_7b"] = block_e(1280)
    P["Mixed_7c"] = block_e(2048)
    return P


# ---------------------------------------------------------------------------
# Forward pass == PartialInceptionNetwork.forward
# ---------------------------------------------------------------------------
def partial_inception_forward(params, x):
    assert x.shape[1:] == (3, 299, 299), \
        "Expected input shape to be: (N,3,299,299), but got {}".format(x.shape)
    # Single NCHW -> NHWC layout change at the boundary; everything else NHWC.
    x = jnp.transpose(x, (0, 2, 3, 1))

    # x*2-1 followed by torchvision transform_input is a per-channel affine
    # x01*(4*std_c) + (2*mean_c - 1 - 2*std_c); fold it into Conv2d_1a_3x3.
    std = jnp.array([0.229, 0.224, 0.225], jnp.float32)
    mean = jnp.array([0.485, 0.456, 0.406], jnp.float32)
    in_scale = 4.0 * std
    in_shift = 2.0 * mean - 1.0 - 2.0 * std

    x = conv_bn_relu(x, params["Conv2d_1a_3x3"], stride=(2, 2),
                     in_scale=in_scale, in_shift=in_shift)          # 149
    x = conv_bn_relu(x, params["Conv2d_2a_3x3"])                    # 147
    x = conv_bn_relu(x, params["Conv2d_2b_3x3"], padding=(1, 1))    # 147
    x = max_pool_3x3_s2(x)                                          # 73
    x = conv_bn_relu(x, params["Conv2d_3b_1x1"])                    # 73
    x = conv_bn_relu(x, params["Conv2d_4a_3x3"])                    # 71
    x = max_pool_3x3_s2(x)                                          # 35
    x = inception_a(x, params["Mixed_5b"])
    x = inception_a(x, params["Mixed_5c"])
    x = inception_a(x, params["Mixed_5d"])
    x = inception_b(x, params["Mixed_6a"])                          # 17
    x = inception_c(x, params["Mixed_6b"])
    x = inception_c(x, params["Mixed_6c"])
    x = inception_c(x, params["Mixed_6d"])
    x = inception_c(x, params["Mixed_6e"])
    x = inception_d(x, params["Mixed_7a"])                          # 8
    x = inception_e(x, params["Mixed_7b"])
    mixed_7c = inception_e(x, params["Mixed_7c"])                   # (N,8,8,2048)
    activations = global_avg_pool(mixed_7c)                         # (N,2048) f32
    return activations


if __name__ == "__main__":
    key = jax.random.PRNGKey(0)
    x = jax.random.uniform(key, (2, 3, 299, 299), dtype=jnp.float32)  # [0, 1)
    params = init_params()
    out = partial_inception_forward(params, x)
    out = jax.block_until_ready(out)
    assert out.shape == (2, 2048), out.shape
    assert out.dtype == jnp.float32, out.dtype
    assert bool(jnp.all(jnp.isfinite(out)))
    print("KERNEL_OK")
</pallas_src>

<mosaic_0001>
module attributes {stable_mosaic.version = 11 : i64} {
  func.func @_mm_bias_relu_kernel(%arg0: i32, %arg1: memref<512x27xbf16, #tpu.memory_space<vmem>>, %arg2: memref<27x32xbf16, #tpu.memory_space<vmem>>, %arg3: memref<1x32xf32, #tpu.memory_space<vmem>>, %arg4: memref<512x32xbf16, #tpu.memory_space<vmem>>) attributes {dimension_semantics = [#tpu.dimension_semantics<parallel>], iteration_bounds = array<i64: 87>, scalar_prefetch = 0 : i64, scratch_operands = 0 : i64, tpu.core_type = #tpu.core_type<tc>, window_params = [{transform_indices = @transform_0, window_bounds = array<i64: 512, 27>}, {pipeline_mode = #tpu.pipeline_mode<synchronous>, transform_indices = @transform_1, window_bounds = array<i64: 27, 32>}, {pipeline_mode = #tpu.pipeline_mode<synchronous>, transform_indices = @transform_2, window_bounds = array<i64: 1, 32>}, {transform_indices = @transform_3, window_bounds = array<i64: 512, 32>}]} {
    %c0 = arith.constant 0 : index
    %c0_0 = arith.constant 0 : index
    %0 = vector.load %arg1[%c0, %c0_0] : memref<512x27xbf16, #tpu.memory_space<vmem>>, vector<512x27xbf16>
    %c0_1 = arith.constant 0 : index
    %c0_2 = arith.constant 0 : index
    %1 = vector.load %arg2[%c0_1, %c0_2] : memref<27x32xbf16, #tpu.memory_space<vmem>>, vector<27x32xbf16>
    %cst = arith.constant dense<0.000000e+00> : vector<512x32xf32>
    %2 = tpu.matmul %0, %1, %cst {dimension_numbers = #tpu.dot_dimension_numbers<[1], [0], [0], [1], [0, 0, 1, 1], [], []>} : vector<512x27xbf16>, vector<27x32xbf16>, vector<512x32xf32> -> vector<512x32xf32>
    %c0_3 = arith.constant 0 : index
    %c0_4 = arith.constant 0 : index
    %3 = vector.load %arg3[%c0_3, %c0_4] : memref<1x32xf32, #tpu.memory_space<vmem>>, vector<1x32xf32>
    %4 = vector.broadcast %3 : vector<1x32xf32> to vector<512x32xf32>
    %5 = arith.addf %2, %4 : vector<512x32xf32>
    %cst_5 = arith.constant 0.000000e+00 : f32
    %6 = vector.broadcast %cst_5 : f32 to vector<512x32xf32>
    %7 = arith.maximumf %5, %6 : vector<512x32xf32>
    %8 = arith.truncf %7 : vector<512x32xf32> to vector<512x32xbf16>
    %c0_6 = arith.constant 0 : index
    %c0_7 = arith.constant 0 : index
    %9 = vector.load %arg4[%c0_6, %c0_7] : memref<512x32xbf16, #tpu.memory_space<vmem>>, vector<512x32xbf16>
    tpu.vector_store %arg4[%c0_6, %c0_7], %8 {strides = array<i32>} : memref<512x32xbf16, #tpu.memory_space<vmem>>, vector<512x32xbf16>,
    return
  }
  func.func @transform_0(%arg0: i32) -> (i32, i32) {
    %c0_i32 = arith.constant 0 : i32
    %c0_i32_0 = arith.constant 0 : i32
    return %arg0, %c0_i32 : i32, i32
  }
  func.func @transform_1(%arg0: i32) -> (i32, i32) {
    %c0_i32 = arith.constant 0 : i32
    %c0_i32_0 = arith.constant 0 : i32
    %c0_i32_1 = arith.constant 0 : i32
    return %c0_i32, %c0_i32_0 : i32, i32
  }
  func.func @transform_2(%arg0: i32) -> (i32, i32) {
    %c0_i32 = arith.constant 0 : i32
    %c0_i32_0 = arith.constant 0 : i32
    %c0_i32_1 = arith.constant 0 : i32
    return %c0_i32, %c0_i32_0 : i32, i32
  }
  func.func @transform_3(%arg0: i32) -> (i32, i32) {
    %c0_i32 = arith.constant 0 : i32
    %c0_i32_0 = arith.constant 0 : i32
    return %arg0, %c0_i32 : i32, i32
  }
}

</mosaic_0001>

<llo_original>
// kernel: tpu_custom_call.1
$region0: #{tpu_custom_call.1}
  #allocation0 [shape = 'u32[]', space=smem, size = 0x4, offset = 0x4, fixed_abs, tag = 'smem constant byte address 0x4 - core index']
  #allocation1 [shape = 'u32[144,128]{1,0:T(1,128)}', space=vmem, size = 0x12000, scoped, tag = 'internal scratch']
  %s0 = inlined_call_operand.vmem [shape: bf16[44402,27], index: 0, kind: input, shape index: {}]
  %s1 = inlined_call_operand.vmem [shape: bf16[27,32], index: 1, kind: input, shape index: {}]
  %s2 = inlined_call_operand.vmem [shape: f32[1,32], index: 2, kind: input, shape index: {}]
  %s3 = inlined_call_operand.vmem [shape: bf16[44402,32], index: 3, kind: output, shape index: {}]
  %s4 = sld [smem:[#allocation0]]
  $region89: #{tpu_custom_call.1} parent=0
    _
  %s6 = ssub.s32 1, %s4
  %s7 = scalar_select 0, %s6, %s4
  $region1: #{tpu_custom_call.1} parent=0
    #allocation2 [shape = 'u8[262144]{0}', space=vmem, size = 0x40000, scoped, tag = 'output window, operand 0']
    loop: start=0, step=1, limit=89
    $region2: #{tpu_custom_call.1} parent=1 // loop_pre_header
      _
    $region3: #{tpu_custom_call.1} parent=1 // loop_header
      %s9 = sphi 0, %s13
      %p10 = scmp.ge.s32.totalorder %s9, 89
      %s19 = sphi 0, %s21
      %s22 = sphi 0, %s19
      %s23 = sphi 0, %s22
      %s39 = sphi 0, %s23
      %s43 = sphi 0, %s43
      %s45 = sphi 0, %s43
      %s46 = sphi 0, %s45
      %s60 = sphi 0, %s46
      %s64 = sphi 0, %s64
      %s66 = sphi 0, %s64
      %s67 = sphi 0, %s66
      %s81 = sphi 0, %s67
      %s87 = sphi 0, %s89
      %s90 = sphi 0, %s87
      %s91 = sphi 0, %s90
      %s107 = sphi 0, %s91
    $region4: #{tpu_custom_call.1} parent=1 // loop_header_branch
      %12 = sbr.rel (%p10) target = $region8
    $region5: #{tpu_custom_call.1} parent=1 // loop_body
      %s14 = ssub.s32 %s9, 1
      %s15 = ssub.s32 %s9, 2
      %s16 = sadd.s32 %s9, 1
      %s17 = ssub.s32 %s9, %s16
      %p18 = scmp.eq.s32.totalorder %s17, 0
      %s20 = sadd.s32 %s19, 1
      %s21 = scalar_select %p18, %s19, %s20
      %p24 = pneg %p18
      %p25 = scmp.eq.s32.totalorder %s9, 86
      %p26 = por %p24, %p25
      %p27 = scmp.ne.s32.totalorder %s19, %s22
      %p28 = scmp.eq.s32.totalorder %s9, 0
      %p29 = por %p27, %p28
      %p30 = scmp.ne.s32.totalorder %s19, %s22
      %p31 = scmp.eq.s32.totalorder %s14, 86
      %p32 = por %p30, %p31
      %p33 = scmp.ne.s32.totalorder %s22, %s23
      %p34 = scmp.eq.s32.totalorder %s14, 0
      %p35 = por %p33, %p34
      %p36 = scmp.ne.s32.totalorder %s22, %s23
      %p37 = scmp.eq.s32.totalorder %s15, 86
      %p38 = por %p36, %p37
      %p40 = scmp.ne.s32.totalorder %s23, %s39
      %p41 = scmp.eq.s32.totalorder %s15, 0
      %p42 = por %p40, %p41
      %s44 = sadd.s32 %s43, 1
      %p47 = scmp.eq.s32.totalorder %s9, 86
      %p48 = scmp.ne.s32.totalorder %s43, %s45
      %p49 = scmp.eq.s32.totalorder %s9, 0
      %p50 = por %p48, %p49
      %p51 = scmp.ne.s32.totalorder %s43, %s45
      %p52 = scmp.eq.s32.totalorder %s14, 86
      %p53 = por %p51, %p52
      %p54 = scmp.ne.s32.totalorder %s45, %s46
      %p55 = scmp.eq.s32.totalorder %s14, 0
      %p56 = por %p54, %p55
      %p57 = scmp.ne.s32.totalorder %s45, %s46
      %p58 = scmp.eq.s32.totalorder %s15, 86
      %p59 = por %p57, %p58
      %p61 = scmp.ne.s32.totalorder %s46, %s60
      %p62 = scmp.eq.s32.totalorder %s15, 0
      %p63 = por %p61, %p62
      %s65 = sadd.s32 %s64, 1
      %p68 = scmp.eq.s32.totalorder %s9, 86
      %p69 = scmp.ne.s32.totalorder %s64, %s66
      %p70 = scmp.eq.s32.totalorder %s9, 0
      %p71 = por %p69, %p70
      %p72 = scmp.ne.s32.totalorder %s64, %s66
      %p73 = scmp.eq.s32.totalorder %s14, 86
      %p74 = por %p72, %p73
      %p75 = scmp.ne.s32.totalorder %s66, %s67
      %p76 = scmp.eq.s32.totalorder %s14, 0
      %p77 = por %p75, %p76
      %p78 = scmp.ne.s32.totalorder %s66, %s67
      %p79 = scmp.eq.s32.totalorder %s15, 86
      %p80 = por %p78, %p79
      %p82 = scmp.ne.s32.totalorder %s67, %s81
      %p83 = scmp.eq.s32.totalorder %s15, 0
      %p84 = por %p82, %p83
      %s85 = ssub.s32 %s9, %s16
      %p86 = scmp.eq.s32.totalorder %s85, 0
      %s88 = sadd.s32 %s87, 1
      %s89 = scalar_select %p86, %s87, %s88
      %p92 = pneg %p86
      %p93 = scmp.eq.s32.totalorder %s9, 86
      %p94 = por %p92, %p93
      %p95 = scmp.ne.s32.totalorder %s87, %s90
      %p96 = scmp.eq.s32.totalorder %s9, 0
      %p97 = por %p95, %p96
      %p98 = scmp.ne.s32.totalorder %s87, %s90
      %p99 = scmp.eq.s32.totalorder %s14, 86
      %p100 = por %p98, %p99
      %p101 = scmp.ne.s32.totalorder %s90, %s91
      %p102 = scmp.eq.s32.totalorder %s14, 0
      %p103 = por %p101, %p102
      %p104 = scmp.ne.s32.totalorder %s90, %s91
      %p105 = scmp.eq.s32.totalorder %s15, 86
      %p106 = por %p104, %p105
      %p108 = scmp.ne.s32.totalorder %s91, %s107
      %p109 = scmp.eq.s32.totalorder %s15, 0
      %p110 = por %p108, %p109
      %p111 = scmp.le.s32.totalorder 1, %s9
      %p112 = scmp.lt.s32.totalorder %s9, 88
      %p113 = pnand %p111, %p112
      %p114 = pneg %p113
      // Predicated region
      $region9: #{tpu_custom_call.1} parent=5 // pred_check
        _
      $region10: #{tpu_custom_call.1} parent=5 // pred_check_branch
        %116 = sbr.rel (%p113) target = $region12
      $region11: #{tpu_custom_call.1} parent=5 // pred_region
        %s117 = ssub.s32 %s9, 1
        // Predicated region
        $region13: #{tpu_custom_call.1} parent=11 // pred_check
          %p118 = pneg %p56
        $region14: #{tpu_custom_call.1} parent=11 // pred_check_branch
          %120 = sbr.rel (%p118) target = $region16
        $region15: #{tpu_custom_call.1} parent=11 // pred_region
          _
        $region16: #{tpu_custom_call.1} parent=11 // pred_fallthru
          _
        // Predicated region
        $region17: #{tpu_custom_call.1} parent=11 // pred_check
          %p121 = pneg %p77
        $region18: #{tpu_custom_call.1} parent=11 // pred_check_branch
          %123 = sbr.rel (%p121) target = $region20
        $region19: #{tpu_custom_call.1} parent=11 // pred_region
          _
        $region20: #{tpu_custom_call.1} parent=11 // pred_fallthru
          _
      $region12: #{tpu_custom_call.1} parent=5 // pred_fallthru
        _
      %p124 = scmp.lt.s32.totalorder %s9, 87
      // Predicated region
      $region21: #{tpu_custom_call.1} parent=5 // pred_check
        %p125 = pneg %p124
      $region22: #{tpu_custom_call.1} parent=5 // pred_check_branch
        %127 = sbr.rel (%p125) target = $region24
      $region23: #{tpu_custom_call.1} parent=5 // pred_region
        // Predicated region
        $region25: #{tpu_custom_call.1} parent=23 // pred_check
          %p128 = pneg %p29
        $region26: #{tpu_custom_call.1} parent=23 // pred_check_branch
          %130 = sbr.rel (%p128) target = $region28
        $region27: #{tpu_custom_call.1} parent=23 // pred_region
          %s131 = smul.u32 64, %s9
          %s132 = ssub.s32 5551, %s131
          %p133 = scmp.lt.s32.totalorder %s132, 64
          %s134 = scalar_select %p133, %s132, 64
          %s135 = smul.u32 64, %s134
          %p136 = scmp.lt.s32.totalorder %s131, 5550
          %s137 = scalar_select %p136, %s131, 5550
          %s138 = smul.addr %s137, 4
          %s139 = scalar_lea.vmem %s0, %s138
          %s140 = smul.u32 64, %s9
          %s141 = ssub.s32 5551, %s140
          %p142 = scmp.lt.s32.totalorder %s141, 64
          %s143 = scalar_select %p142, %s141, 64
          %s144 = smul.u32 64, %s143
        $region28: #{tpu_custom_call.1} parent=23 // pred_fallthru
          _
      $region24: #{tpu_custom_call.1} parent=5 // pred_fallthru
        _
      %p145 = scmp.le.s32.totalorder 1, %s9
      %p146 = scmp.lt.s32.totalorder %s9, 88
      %p147 = pnand %p145, %p146
      %p148 = pneg %p147
      // Predicated region
      $region29: #{tpu_custom_call.1} parent=5 // pred_check
        _
      $region30: #{tpu_custom_call.1} parent=5 // pred_check_branch
        %150 = sbr.rel (%p147) target = $region32
      $region31: #{tpu_custom_call.1} parent=5 // pred_region
        %s151 = ssub.s32 %s9, 1
        %s152 = smul.u32 64, %s14
        %s153 = ssub.s32 5551, %s152
        %p154 = scmp.lt.s32.totalorder %s153, 64
        %s155 = scalar_select %p154, %s153, 64
        %s156 = smul.u32 64, %s155
        %p157 = scmp.lt.s32.totalorder %s152, 5550
        %s158 = scalar_select %p157, %s152, 5550
        %s159 = smul.addr %s158, 4
        %s160 = scalar_lea.vmem %s0, %s159
        %p161 = pneg %p35
        %p162 = pneg %p32
        %p163 = pneg %p56
        %p164 = pneg %p53
        %p165 = pneg %p77
        %p166 = pneg %p74
        %p167 = pneg %p103
        %p168 = pneg %p100
        %s169 = sand.u32 %s90, 1
        %s170 = sand.u32 %s90, 1
        %s171 = smul.addr %s170, 256
        %s172 = scalar_lea.vmem [#allocation2], %s171
        %s173 = smul.u32 64, %s14
        %s174 = ssub.s32 5551, %s173
        %p175 = scmp.lt.s32.totalorder %s174, 64
        %s176 = scalar_select %p175, %s174, 64
        %s177 = smul.u32 64, %s176
        %p178 = scmp.lt.s32.totalorder %s173, 5550
        %s179 = scalar_select %p178, %s173, 5550
        %s180 = smul.addr %s179, 4
        %s181 = scalar_lea.vmem %s0, %s180
        %s182 = smul.u32 64, %s14
        %s183 = ssub.s32 5551, %s182
        %p184 = scmp.lt.s32.totalorder %s183, 64
        %s185 = scalar_select %p184, %s183, 64
        %s186 = smul.u32 64, %s185
        %s187 = smul.u32 64, %s14
        %s188 = ssub.s32 5551, %s187
        %p189 = scmp.lt.s32.totalorder %s188, 64
        %s190 = scalar_select %p189, %s188, 64
        %s191 = smul.u32 64, %s190
        %v193 = vld [vmem:[%s181] sm:$0xf]
        %v194 = vld [vmem:[%s181 + $0x4] sm:$0xf]
        %v195 = vld [vmem:[%s181 + $0x8] sm:$0xf]
        %v196 = vld [vmem:[%s181 + $0xc] sm:$0xf]
        %v197 = vld [vmem:[%s181 + $0x10] sm:$0xf]
        %v198 = vld [vmem:[%s181 + $0x14] sm:$0xf]
        %v199 = vld [vmem:[%s181 + $0x18] sm:$0xf]
        %v200 = vld [vmem:[%s181 + $0x1c] sm:$0xf]
        %v201 = vld [vmem:[%s181 + $0x20] sm:$0xf]
        %v202 = vld [vmem:[%s181 + $0x24] sm:$0xf]
        %v203 = vld [vmem:[%s181 + $0x28] sm:$0xf]
        %v204 = vld [vmem:[%s181 + $0x2c] sm:$0xf]
        %v205 = vld [vmem:[%s181 + $0x30] sm:$0xf]
        %v206 = vld [vmem:[%s181 + $0x34] sm:$0xf]
        %v207 = vld [vmem:[%s181 + $0x38] sm:$0xf]
        %v208 = vld [vmem:[%s181 + $0x3c] sm:$0xf]
        %v209 = vld [vmem:[%s181 + $0x40] sm:$0xf]
        %v210 = vld [vmem:[%s181 + $0x44] sm:$0xf]
        %v211 = vld [vmem:[%s181 + $0x48] sm:$0xf]
        %v212 = vld [vmem:[%s181 + $0x4c] sm:$0xf]
        %v213 = vld [vmem:[%s181 + $0x50] sm:$0xf]
        %v214 = vld [vmem:[%s181 + $0x54] sm:$0xf]
        %v215 = vld [vmem:[%s181 + $0x58] sm:$0xf]
        %v216 = vld [vmem:[%s181 + $0x5c] sm:$0xf]
        %v217 = vld [vmem:[%s181 + $0x60] sm:$0xf]
        %v218 = vld [vmem:[%s181 + $0x64] sm:$0xf]
        %v219 = vld [vmem:[%s181 + $0x68] sm:$0xf]
        %v220 = vld [vmem:[%s181 + $0x6c] sm:$0xf]
        %v221 = vld [vmem:[%s181 + $0x70] sm:$0xf]
        %v222 = vld [vmem:[%s181 + $0x74] sm:$0xf]
        %v223 = vld [vmem:[%s181 + $0x78] sm:$0xf]
        %v224 = vld [vmem:[%s181 + $0x7c] sm:$0xf]
        %v225 = vld [vmem:[%s181 + $0x80] sm:$0xf]
        %v226 = vld [vmem:[%s181 + $0x84] sm:$0xf]
        %v227 = vld [vmem:[%s181 + $0x88] sm:$0xf]
        %v228 = vld [vmem:[%s181 + $0x8c] sm:$0xf]
        %v229 = vld [vmem:[%s181 + $0x90] sm:$0xf]
        %v230 = vld [vmem:[%s181 + $0x94] sm:$0xf]
        %v231 = vld [vmem:[%s181 + $0x98] sm:$0xf]
        %v232 = vld [vmem:[%s181 + $0x9c] sm:$0xf]
        %v233 = vld [vmem:[%s181 + $0xa0] sm:$0xf]
        %v234 = vld [vmem:[%s181 + $0xa4] sm:$0xf]
        %v235 = vld [vmem:[%s181 + $0xa8] sm:$0xf]
        %v236 = vld [vmem:[%s181 + $0xac] sm:$0xf]
        %v237 = vld [vmem:[%s181 + $0xb0] sm:$0xf]
        %v238 = vld [vmem:[%s181 + $0xb4] sm:$0xf]
        %v239 = vld [vmem:[%s181 + $0xb8] sm:$0xf]
        %v240 = vld [vmem:[%s181 + $0xbc] sm:$0xf]
        %v241 = vld [vmem:[%s181 + $0xc0] sm:$0xf]
        %v242 = vld [vmem:[%s181 + $0xc4] sm:$0xf]
        %v243 = vld [vmem:[%s181 + $0xc8] sm:$0xf]
        %v244 = vld [vmem:[%s181 + $0xcc] sm:$0xf]
        %v245 = vld [vmem:[%s181 + $0xd0] sm:$0xf]
        %v246 = vld [vmem:[%s181 + $0xd4] sm:$0xf]
        %v247 = vld [vmem:[%s181 + $0xd8] sm:$0xf]
        %v248 = vld [vmem:[%s181 + $0xdc] sm:$0xf]
        %v249 = vld [vmem:[%s181 + $0xe0] sm:$0xf]
        %v250 = vld [vmem:[%s181 + $0xe4] sm:$0xf]
        %v251 = vld [vmem:[%s181 + $0xe8] sm:$0xf]
        %v252 = vld [vmem:[%s181 + $0xec] sm:$0xf]
        %v253 = vld [vmem:[%s181 + $0xf0] sm:$0xf]
        %v254 = vld [vmem:[%s181 + $0xf4] sm:$0xf]
        %v255 = vld [vmem:[%s181 + $0xf8] sm:$0xf]
        %v256 = vld [vmem:[%s181 + $0xfc] sm:$0xf]
        %v257 = vld [vmem:[%s1] sm:$0xf]
        %v258 = vld [vmem:[%s1 + $0x4] sm:$0xf]
        %v259 = vld [vmem:[%s1 + $0x8] sm:$0xf]
        %v260 = vld [vmem:[%s1 + $0xc] sm:$0x3]
        %v261 = vld [vmem:[%s2] sm:$0x1]
        %v263 = vlaneseq
        %v264 = vshrl.u32 %v263, 7
        %v265 = vsub.s32 0, %v264
        %v266 = vrot.slane %v261, %v265
        %v332 = vunpack.c.l.b16 %v193
        %v333 = vunpack.c.l.b16 %v194
        %v334 = vunpack.c.l.b16 %v195
        %v335 = vunpack.c.l.b16 %v196
        %v336 = vunpack.c.l.b16 %v197
        %v337 = vunpack.c.l.b16 %v198
        %v338 = vunpack.c.l.b16 %v199
        %v339 = vunpack.c.l.b16 %v200
        %v340 = vunpack.c.l.b16 %v201
        %v341 = vunpack.c.l.b16 %v202
        %v342 = vunpack.c.l.b16 %v203
        %v343 = vunpack.c.l.b16 %v204
        %v344 = vunpack.c.l.b16 %v205
        %v345 = vunpack.c.l.b16 %v206
        %v346 = vunpack.c.l.b16 %v207
        %v347 = vunpack.c.l.b16 %v208
        %v348 = vunpack.c.l.b16 %v209
        %v349 = vunpack.c.l.b16 %v210
        %v350 = vunpack.c.l.b16 %v211
        %v351 = vunpack.c.l.b16 %v212
        %v352 = vunpack.c.l.b16 %v213
        %v353 = vunpack.c.l.b16 %v214
        %v354 = vunpack.c.l.b16 %v215
        %v355 = vunpack.c.l.b16 %v216
        %v356 = vunpack.c.l.b16 %v217
        %v357 = vunpack.c.l.b16 %v218
        %v358 = vunpack.c.l.b16 %v219
        %v359 = vunpack.c.l.b16 %v220
        %v360 = vunpack.c.l.b16 %v221
        %v361 = vunpack.c.l.b16 %v222
        %v362 = vunpack.c.l.b16 %v223
        %v363 = vunpack.c.l.b16 %v224
        %v364 = vunpack.c.l.b16 %v225
        %v365 = vunpack.c.l.b16 %v226
        %v366 = vunpack.c.l.b16 %v227
        %v367 = vunpack.c.l.b16 %v228
        %v368 = vunpack.c.l.b16 %v229
        %v369 = vunpack.c.l.b16 %v230
        %v370 = vunpack.c.l.b16 %v231
        %v371 = vunpack.c.l.b16 %v232
        %v372 = vunpack.c.l.b16 %v233
        %v373 = vunpack.c.l.b16 %v234
        %v374 = vunpack.c.l.b16 %v235
        %v375 = vunpack.c.l.b16 %v236
        %v376 = vunpack.c.l.b16 %v237
        %v377 = vunpack.c.l.b16 %v238
        %v378 = vunpack.c.l.b16 %v239
        %v379 = vunpack.c.l.b16 %v240
        %v380 = vunpack.c.l.b16 %v241
        %v381 = vunpack.c.l.b16 %v242
        %v382 = vunpack.c.l.b16 %v243
        %v383 = vunpack.c.l.b16 %v244
        %v384 = vunpack.c.l.b16 %v245
        %v385 = vunpack.c.l.b16 %v246
        %v386 = vunpack.c.l.b16 %v247
        %v387 = vunpack.c.l.b16 %v248
        %v388 = vunpack.c.l.b16 %v249
        %v389 = vunpack.c.l.b16 %v250
        %v390 = vunpack.c.l.b16 %v251
        %v391 = vunpack.c.l.b16 %v252
        %v392 = vunpack.c.l.b16 %v253
        %v393 = vunpack.c.l.b16 %v254
        %v394 = vunpack.c.l.b16 %v255
        %v395 = vunpack.c.l.b16 %v256
        %v396 = vpack.c.b16 %v333, %v332
        %v397 = vpack.c.b16 %v335, %v334
        %v398 = vpack.c.b16 %v337, %v336
        %v399 = vpack.c.b16 %v339, %v338
        %v400 = vpack.c.b16 %v341, %v340
        %v401 = vpack.c.b16 %v343, %v342
        %v402 = vpack.c.b16 %v345, %v344
        %v403 = vpack.c.b16 %v347, %v346
        %v404 = vpack.c.b16 %v349, %v348
        %v405 = vpack.c.b16 %v351, %v350
        %v406 = vpack.c.b16 %v353, %v352
        %v407 = vpack.c.b16 %v355, %v354
        %v408 = vpack.c.b16 %v357, %v356
        %v409 = vpack.c.b16 %v359, %v358
        %v410 = vpack.c.b16 %v361, %v360
        %v411 = vpack.c.b16 %v363, %v362
        %v412 = vpack.c.b16 %v365, %v364
        %v413 = vpack.c.b16 %v367, %v366
        %v414 = vpack.c.b16 %v369, %v368
        %v415 = vpack.c.b16 %v371, %v370
        %v416 = vpack.c.b16 %v373, %v372
        %v417 = vpack.c.b16 %v375, %v374
        %v418 = vpack.c.b16 %v377, %v376
        %v419 = vpack.c.b16 %v379, %v378
        %v420 = vpack.c.b16 %v381, %v380
        %v421 = vpack.c.b16 %v383, %v382
        %v422 = vpack.c.b16 %v385, %v384
        %v423 = vpack.c.b16 %v387, %v386
        %v424 = vpack.c.b16 %v389, %v388
        %v425 = vpack.c.b16 %v391, %v390
        %v426 = vpack.c.b16 %v393, %v392
        %v427 = vpack.c.b16 %v395, %v394
        %v432 = vunpack.c.l.b16 %v257
        %v433 = vunpack.c.l.b16 %v258
        %v434 = vunpack.c.l.b16 %v259
        %v435 = vunpack.c.l.b16 %v260
        %v436 = vpack.c.b16 %v433, %v432
        %v437 = vpack.c.b16 %v435, %v434
        %vm439 = vcmask 220160
        %v441 = vsel %vm439, %v396, 0
        %v444 = vsel %vm439, %v397, 0
        %v447 = vsel %vm439, %v398, 0
        %v450 = vsel %vm439, %v399, 0
        %v453 = vsel %vm439, %v400, 0
        %v456 = vsel %vm439, %v401, 0
        %v459 = vsel %vm439, %v402, 0
        %v462 = vsel %vm439, %v403, 0
        %v465 = vsel %vm439, %v404, 0
        %v468 = vsel %vm439, %v405, 0
        %v471 = vsel %vm439, %v406, 0
        %v474 = vsel %vm439, %v407, 0
        %v477 = vsel %vm439, %v408, 0
        %v480 = vsel %vm439, %v409, 0
        %v483 = vsel %vm439, %v410, 0
        %v486 = vsel %vm439, %v411, 0
        %v489 = vsel %vm439, %v412, 0
        %v492 = vsel %vm439, %v413, 0
        %v495 = vsel %vm439, %v414, 0
        %v498 = vsel %vm439, %v415, 0
        %v501 = vsel %vm439, %v416, 0
        %v504 = vsel %vm439, %v417, 0
        %v507 = vsel %vm439, %v418, 0
        %v510 = vsel %vm439, %v419, 0
        %v513 = vsel %vm439, %v420, 0
        %v516 = vsel %vm439, %v421, 0
        %v519 = vsel %vm439, %v422, 0
        %v522 = vsel %vm439, %v423, 0
        %v525 = vsel %vm439, %v424, 0
        %v528 = vsel %vm439, %v425, 0
        %v531 = vsel %vm439, %v426, 0
        %v534 = vsel %vm439, %v427, 0
        %vm536 = vcmask 1044480
        %vm537 = vcmask 1045504
        %v538 = vsel %vm536, 4294967295, 65535
        %v539 = vsel %vm537, %v538, 0
        %v541 = vand.u32 %v437, %v539
        %543 = vmatprep.subr.bf16.mxu0 0
        %544 = vmatpush1.bf16.msra.mxu0 %v436
        %545 = vmatprep.subr.bf16.mxu0 0
        %546 = vmatpush1.bf16.msra.mxu0 %v541
        %547 = vmatprep.subr.bf16.mxu0 0
        %548 = vmatpush1.bf16.msra.mxu0 0
        %549 = vmatprep.subr.bf16.mxu0 0
        %550 = vmatpush1.bf16.msra.mxu0 0
        %551 = vmatprep.subr.bf16.mxu0 0
        %552 = vmatpush1.bf16.msra.mxu0 0
        %553 = vmatprep.subr.bf16.mxu0 0
        %554 = vmatpush1.bf16.msra.mxu0 0
        %555 = vmatprep.subr.bf16.mxu0 0
        %556 = vmatpush1.bf16.msra.mxu0 0
        %557 = vmatprep.subr.bf16.mxu0 0
        %558 = vmatpush1.bf16.msra.mxu0 0
        %559 = vmatprep.subr.bf16.mxu0 0
        %560 = vmatpush1.bf16.msra.mxu0 0
        %561 = vmatprep.subr.bf16.mxu0 0
        %562 = vmatpush1.bf16.msra.mxu0 0
        %563 = vmatprep.subr.bf16.mxu0 0
        %564 = vmatpush1.bf16.msra.mxu0 0
        %565 = vmatprep.subr.bf16.mxu0 0
        %566 = vmatpush1.bf16.msra.mxu0 0
        %567 = vmatprep.subr.bf16.mxu0 0
        %568 = vmatpush1.bf16.msra.mxu0 0
        %569 = vmatprep.subr.bf16.mxu0 0
        %570 = vmatpush1.bf16.msra.mxu0 0
        %571 = vmatprep.subr.bf16.mxu0 0
        %572 = vmatpush1.bf16.msra.mxu0 0
        %573 = vmatprep.subr.bf16.mxu0 0
        %574 = vmatpush1.bf16.msra.mxu0 0
        %575 = vmatprep.mubr.bf16.mxu0 0
        %576 = vmatmul.mubr.bf16.gmra.mrb[0].mxu0 %v441
        %v577 = vpop.f32.mrb[0].mxu0
        %v578 = vadd.f32 %v266, %v577
        %v579 = vpop.f32.mrb[0].mxu0
        %v580 = vpop.f32.mrb[0].mxu0
        %v581 = vadd.f32 %v266, %v580
        %v582 = vpop.f32.mrb[0].mxu0
        %583 = vmatprep.mubr.bf16.mxu0 0
        %584 = vmatmul.mubr.bf16.gmra.mrb[0].mxu0 %v444
        %v585 = vpop.f32.mrb[0].mxu0
        %v586 = vadd.f32 %v266, %v585
        %v587 = vpop.f32.mrb[0].mxu0
        %v588 = vpop.f32.mrb[0].mxu0
        %v589 = vadd.f32 %v266, %v588
        %v590 = vpop.f32.mrb[0].mxu0
        %591 = vmatprep.mubr.bf16.mxu0 0
        %592 = vmatmul.mubr.bf16.gmra.mrb[0].mxu0 %v447
        %v593 = vpop.f32.mrb[0].mxu0
        %v594 = vadd.f32 %v266, %v593
        %v595 = vpop.f32.mrb[0].mxu0
        %v596 = vpop.f32.mrb[0].mxu0
        %v597 = vadd.f32 %v266, %v596
        %v598 = vpop.f32.mrb[0].mxu0
        %599 = vmatprep.mubr.bf16.mxu0 0
        %600 = vmatmul.mubr.bf16.gmra.mrb[0].mxu0 %v450
        %v601 = vpop.f32.mrb[0].mxu0
        %v602 = vadd.f32 %v266, %v601
        %v603 = vpop.f32.mrb[0].mxu0
        %v604 = vpop.f32.mrb[0].mxu0
        %v605 = vadd.f32 %v266, %v604
        %v606 = vpop.f32.mrb[0].mxu0
        %607 = vmatprep.mubr.bf16.mxu0 0
        %608 = vmatmul.mubr.bf16.gmra.mrb[0].mxu0 %v453
        %v609 = vpop.f32.mrb[0].mxu0
        %v610 = vadd.f32 %v266, %v609
        %v611 = vpop.f32.mrb[0].mxu0
        %v612 = vpop.f32.mrb[0].mxu0
        %v613 = vadd.f32 %v266, %v612
        %v614 = vpop.f32.mrb[0].mxu0
        %615 = vmatprep.mubr.bf16.mxu0 0
        %616 = vmatmul.mubr.bf16.gmra.mrb[0].mxu0 %v456
        %v617 = vpop.f32.mrb[0].mxu0
        %v618 = vadd.f32 %v266, %v617
        %v619 = vpop.f32.mrb[0].mxu0
        %v620 = vpop.f32.mrb[0].mxu0
        %v621 = vadd.f32 %v266, %v620
        %v622 = vpop.f32.mrb[0].mxu0
        %623 = vmatprep.mubr.bf16.mxu0 0
        %624 = vmatmul.mubr.bf16.gmra.mrb[0].mxu0 %v459
        %v625 = vpop.f32.mrb[0].mxu0
        %v626 = vadd.f32 %v266, %v625
        %v627 = vpop.f32.mrb[0].mxu0
        %v628 = vpop.f32.mrb[0].mxu0
        %v629 = vadd.f32 %v266, %v628
        %v630 = vpop.f32.mrb[0].mxu0
        %631 = vmatprep.mubr.bf16.mxu0 0
        %632 = vmatmul.mubr.bf16.gmra.mrb[0].mxu0 %v462
        %v633 = vpop.f32.mrb[0].mxu0
        %v634 = vadd.f32 %v266, %v633
        %v635 = vpop.f32.mrb[0].mxu0
        %v636 = vpop.f32.mrb[0].mxu0
        %v637 = vadd.f32 %v266, %v636
        %v638 = vpop.f32.mrb[0].mxu0
        %639 = vmatprep.mubr.bf16.mxu0 0
        %640 = vmatmul.mubr.bf16.gmra.mrb[0].mxu0 %v465
        %v641 = vpop.f32.mrb[0].mxu0
        %v642 = vadd.f32 %v266, %v641
        %v643 = vpop.f32.mrb[0].mxu0
        %v644 = vpop.f32.mrb[0].mxu0
        %v645 = vadd.f32 %v266, %v644
        %v646 = vpop.f32.mrb[0].mxu0
        %647 = vmatprep.mubr.bf16.mxu0 0
        %648 = vmatmul.mubr.bf16.gmra.mrb[0].mxu0 %v468
        %v649 = vpop.f32.mrb[0].mxu0
        %v650 = vadd.f32 %v266, %v649
        %v651 = vpop.f32.mrb[0].mxu0
        %v652 = vpop.f32.mrb[0].mxu0
        %v653 = vadd.f32 %v266, %v652
        %v654 = vpop.f32.mrb[0].mxu0
        %655 = vmatprep.mubr.bf16.mxu0 0
        %656 = vmatmul.mubr.bf16.gmra.mrb[0].mxu0 %v471
        %v657 = vpop.f32.mrb[0].mxu0
        %v658 = vadd.f32 %v266, %v657
        %v659 = vpop.f32.mrb[0].mxu0
        %v660 = vpop.f32.mrb[0].mxu0
        %v661 = vadd.f32 %v266, %v660
        %v662 = vpop.f32.mrb[0].mxu0
        %663 = vmatprep.mubr.bf16.mxu0 0
        %664 = vmatmul.mubr.bf16.gmra.mrb[0].mxu0 %v474
        %v665 = vpop.f32.mrb[0].mxu0
        %v666 = vadd.f32 %v266, %v665
        %v667 = vpop.f32.mrb[0].mxu0
        %v668 = vpop.f32.mrb[0].mxu0
        %v669 = vadd.f32 %v266, %v668
        %v670 = vpop.f32.mrb[0].mxu0
        %671 = vmatprep.mubr.bf16.mxu0 0
        %672 = vmatmul.mubr.bf16.gmra.mrb[0].mxu0 %v477
        %v673 = vpop.f32.mrb[0].mxu0
        %v674 = vadd.f32 %v266, %v673
        %v675 = vpop.f32.mrb[0].mxu0
        %v676 = vpop.f32.mrb[0].mxu0
        %v677 = vadd.f32 %v266, %v676
        %v678 = vpop.f32.mrb[0].mxu0
        %679 = vmatprep.mubr.bf16.mxu0 0
        %680 = vmatmul.mubr.bf16.gmra.mrb[0].mxu0 %v480
        %v681 = vpop.f32.mrb[0].mxu0
        %v682 = vadd.f32 %v266, %v681
        %v683 = vpop.f32.mrb[0].mxu0
        %v684 = vpop.f32.mrb[0].mxu0
        %v685 = vadd.f32 %v266, %v684
        %v686 = vpop.f32.mrb[0].mxu0
        %687 = vmatprep.mubr.bf16.mxu0 0
        %688 = vmatmul.mubr.bf16.gmra.mrb[0].mxu0 %v483
        %v689 = vpop.f32.mrb[0].mxu0
        %v690 = vadd.f32 %v266, %v689
        %v691 = vpop.f32.mrb[0].mxu0
        %v692 = vpop.f32.mrb[0].mxu0
        %v693 = vadd.f32 %v266, %v692
        %v694 = vpop.f32.mrb[0].mxu0
        %695 = vmatprep.mubr.bf16.mxu0 0
        %696 = vmatmul.mubr.bf16.gmra.mrb[0].mxu0 %v486
        %v697 = vpop.f32.mrb[0].mxu0
        %v698 = vadd.f32 %v266, %v697
        %v699 = vpop.f32.mrb[0].mxu0
        %v700 = vpop.f32.mrb[0].mxu0
        %v701 = vadd.f32 %v266, %v700
        %v702 = vpop.f32.mrb[0].mxu0
        %703 = vmatprep.mubr.bf16.mxu0 0
        %704 = vmatmul.mubr.bf16.gmra.mrb[0].mxu0 %v489
        %v705 = vpop.f32.mrb[0].mxu0
        %v706 = vadd.f32 %v266, %v705
        %v707 = vpop.f32.mrb[0].mxu0
        %v708 = vpop.f32.mrb[0].mxu0
        %v709 = vadd.f32 %v266, %v708
        %v710 = vpop.f32.mrb[0].mxu0
        %711 = vmatprep.mubr.bf16.mxu0 0
        %712 = vmatmul.mubr.bf16.gmra.mrb[0].mxu0 %v492
        %v713 = vpop.f32.mrb[0].mxu0
        %v714 = vadd.f32 %v266, %v713
        %v715 = vpop.f32.mrb[0].mxu0
        %v716 = vpop.f32.mrb[0].mxu0
        %v717 = vadd.f32 %v266, %v716
        %v718 = vpop.f32.mrb[0].mxu0
        %719 = vmatprep.mubr.bf16.mxu0 0
        %720 = vmatmul.mubr.bf16.gmra.mrb[0].mxu0 %v495
        %v721 = vpop.f32.mrb[0].mxu0
        %v722 = vadd.f32 %v266, %v721
        %v723 = vpop.f32.mrb[0].mxu0
        %v724 = vpop.f32.mrb[0].mxu0
        %v725 = vadd.f32 %v266, %v724
        %v726 = vpop.f32.mrb[0].mxu0
        %727 = vmatprep.mubr.bf16.mxu0 0
        %728 = vmatmul.mubr.bf16.gmra.mrb[0].mxu0 %v498
        %v729 = vpop.f32.mrb[0].mxu0
        %v730 = vadd.f32 %v266, %v729
        %v731 = vpop.f32.mrb[0].mxu0
        %v732 = vpop.f32.mrb[0].mxu0
        %v733 = vadd.f32 %v266, %v732
        %v734 = vpop.f32.mrb[0].mxu0
        %735 = vmatprep.mubr.bf16.mxu0 0
        %736 = vmatmul.mubr.bf16.gmra.mrb[0].mxu0 %v501
        %v737 = vpop.f32.mrb[0].mxu0
        %v738 = vadd.f32 %v266, %v737
        %v739 = vpop.f32.mrb[0].mxu0
        %v740 = vpop.f32.mrb[0].mxu0
        %v741 = vadd.f32 %v266, %v740
        %v742 = vpop.f32.mrb[0].mxu0
        %743 = vmatprep.mubr.bf16.mxu0 0
        %744 = vmatmul.mubr.bf16.gmra.mrb[0].mxu0 %v504
        %v745 = vpop.f32.mrb[0].mxu0
        %v746 = vadd.f32 %v266, %v745
        %v747 = vpop.f32.mrb[0].mxu0
        %v748 = vpop.f32.mrb[0].mxu0
        %v749 = vadd.f32 %v266, %v748
        %v750 = vpop.f32.mrb[0].mxu0
        %751 = vmatprep.mubr.bf16.mxu0 0
        %752 = vmatmul.mubr.bf16.gmra.mrb[0].mxu0 %v507
        %v753 = vpop.f32.mrb[0].mxu0
        %v754 = vadd.f32 %v266, %v753
        %v755 = vpop.f32.mrb[0].mxu0
        %v756 = vpop.f32.mrb[0].mxu0
        %v757 = vadd.f32 %v266, %v756
        %v758 = vpop.f32.mrb[0].mxu0
        %759 = vmatprep.mubr.bf16.mxu0 0
        %760 = vmatmul.mubr.bf16.gmra.mrb[0].mxu0 %v510
        %v761 = vpop.f32.mrb[0].mxu0
        %v762 = vadd.f32 %v266, %v761
        %v763 = vpop.f32.mrb[0].mxu0
        %v764 = vpop.f32.mrb[0].mxu0
        %v765 = vadd.f32 %v266, %v764
        %v766 = vpop.f32.mrb[0].mxu0
        %767 = vmatprep.mubr.bf16.mxu0 0
        %768 = vmatmul.mubr.bf16.gmra.mrb[0].mxu0 %v513
        %v769 = vpop.f32.mrb[0].mxu0
        %v770 = vadd.f32 %v266, %v769
        %v771 = vpop.f32.mrb[0].mxu0
        %v772 = vpop.f32.mrb[0].mxu0
        %v773 = vadd.f32 %v266, %v772
        %v774 = vpop.f32.mrb[0].mxu0
        %775 = vmatprep.mubr.bf16.mxu0 0
        %776 = vmatmul.mubr.bf16.gmra.mrb[0].mxu0 %v516
        %v777 = vpop.f32.mrb[0].mxu0
        %v778 = vadd.f32 %v266, %v777
        %v779 = vpop.f32.mrb[0].mxu0
        %v780 = vpop.f32.mrb[0].mxu0
        %v781 = vadd.f32 %v266, %v780
        %v782 = vpop.f32.mrb[0].mxu0
        %783 = vmatprep.mubr.bf16.mxu0 0
        %784 = vmatmul.mubr.bf16.gmra.mrb[0].mxu0 %v519
        %v785 = vpop.f32.mrb[0].mxu0
        %v786 = vadd.f32 %v266, %v785
        %v787 = vpop.f32.mrb[0].mxu0
        %v788 = vpop.f32.mrb[0].mxu0
        %v789 = vadd.f32 %v266, %v788
        %v790 = vpop.f32.mrb[0].mxu0
        %791 = vmatprep.mubr.bf16.mxu0 0
        %792 = vmatmul.mubr.bf16.gmra.mrb[0].mxu0 %v522
        %v793 = vpop.f32.mrb[0].mxu0
        %v794 = vadd.f32 %v266, %v793
        %v795 = vpop.f32.mrb[0].mxu0
        %v796 = vpop.f32.mrb[0].mxu0
        %v797 = vadd.f32 %v266, %v796
        %v798 = vpop.f32.mrb[0].mxu0
        %799 = vmatprep.mubr.bf16.mxu0 0
        %800 = vmatmul.mubr.bf16.gmra.mrb[0].mxu0 %v525
        %v801 = vpop.f32.mrb[0].mxu0
        %v802 = vadd.f32 %v266, %v801
        %v803 = vpop.f32.mrb[0].mxu0
        %v804 = vpop.f32.mrb[0].mxu0
        %v805 = vadd.f32 %v266, %v804
        %v806 = vpop.f32.mrb[0].mxu0
        %807 = vmatprep.mubr.bf16.mxu0 0
        %808 = vmatmul.mubr.bf16.gmra.mrb[0].mxu0 %v528
        %v809 = vpop.f32.mrb[0].mxu0
        %v810 = vadd.f32 %v266, %v809
        %v811 = vpop.f32.mrb[0].mxu0
        %v812 = vpop.f32.mrb[0].mxu0
        %v813 = vadd.f32 %v266, %v812
        %v814 = vpop.f32.mrb[0].mxu0
        %815 = vmatprep.mubr.bf16.mxu0 0
        %816 = vmatmul.mubr.bf16.gmra.mrb[0].mxu0 %v531
        %v817 = vpop.f32.mrb[0].mxu0
        %v818 = vadd.f32 %v266, %v817
        %v819 = vpop.f32.mrb[0].mxu0
        %v820 = vpop.f32.mrb[0].mxu0
        %v821 = vadd.f32 %v266, %v820
        %v822 = vpop.f32.mrb[0].mxu0
        %823 = vmatprep.mubr.bf16.mxu0 0
        %824 = vmatmul.mubr.bf16.gmra.mrb[0].mxu0 %v534
        %v825 = vpop.f32.mrb[0].mxu0
        %v826 = vadd.f32 %v266, %v825
        %v827 = vpop.f32.mrb[0].mxu0
        %v828 = vpop.f32.mrb[0].mxu0
        %v829 = vadd.f32 %v266, %v828
        %v830 = vpop.f32.mrb[0].mxu0
        %831 = vdwg.mxu0
        %v832 = vmax.f32 %v578, 0.0
        %v833 = vmax.f32 %v581, 0.0
        %v834 = vmax.f32 %v586, 0.0
        %v835 = vmax.f32 %v589, 0.0
        %v836 = vmax.f32 %v594, 0.0
        %v837 = vmax.f32 %v597, 0.0
        %v838 = vmax.f32 %v602, 0.0
        %v839 = vmax.f32 %v605, 0.0
        %v840 = vmax.f32 %v610, 0.0
        %v841 = vmax.f32 %v613, 0.0
        %v842 = vmax.f32 %v618, 0.0
        %v843 = vmax.f32 %v621, 0.0
        %v844 = vmax.f32 %v626, 0.0
        %v845 = vmax.f32 %v629, 0.0
        %v846 = vmax.f32 %v634, 0.0
        %v847 = vmax.f32 %v637, 0.0
        %v848 = vmax.f32 %v642, 0.0
        %v849 = vmax.f32 %v645, 0.0
        %v850 = vmax.f32 %v650, 0.0
        %v851 = vmax.f32 %v653, 0.0
        %v852 = vmax.f32 %v658, 0.0
        %v853 = vmax.f32 %v661, 0.0
        %v854 = vmax.f32 %v666, 0.0
        %v855 = vmax.f32 %v669, 0.0
        %v856 = vmax.f32 %v674, 0.0
        %v857 = vmax.f32 %v677, 0.0
        %v858 = vmax.f32 %v682, 0.0
        %v859 = vmax.f32 %v685, 0.0
        %v860 = vmax.f32 %v690, 0.0
        %v861 = vmax.f32 %v693, 0.0
        %v862 = vmax.f32 %v698, 0.0
        %v863 = vmax.f32 %v701, 0.0
        %v864 = vmax.f32 %v706, 0.0
        %v865 = vmax.f32 %v709, 0.0
        %v866 = vmax.f32 %v714, 0.0
        %v867 = vmax.f32 %v717, 0.0
        %v868 = vmax.f32 %v722, 0.0
        %v869 = vmax.f32 %v725, 0.0
        %v870 = vmax.f32 %v730, 0.0
        %v871 = vmax.f32 %v733, 0.0
        %v872 = vmax.f32 %v738, 0.0
        %v873 = vmax.f32 %v741, 0.0
        %v874 = vmax.f32 %v746, 0.0
        %v875 = vmax.f32 %v749, 0.0
        %v876 = vmax.f32 %v754, 0.0
        %v877 = vmax.f32 %v757, 0.0
        %v878 = vmax.f32 %v762, 0.0
        %v879 = vmax.f32 %v765, 0.0
        %v880 = vmax.f32 %v770, 0.0
        %v881 = vmax.f32 %v773, 0.0
        %v882 = vmax.f32 %v778, 0.0
        %v883 = vmax.f32 %v781, 0.0
        %v884 = vmax.f32 %v786, 0.0
        %v885 = vmax.f32 %v789, 0.0
        %v886 = vmax.f32 %v794, 0.0
        %v887 = vmax.f32 %v797, 0.0
        %v888 = vmax.f32 %v802, 0.0
        %v889 = vmax.f32 %v805, 0.0
        %v890 = vmax.f32 %v810, 0.0
        %v891 = vmax.f32 %v813, 0.0
        %v892 = vmax.f32 %v818, 0.0
        %v893 = vmax.f32 %v821, 0.0
        %v894 = vmax.f32 %v826, 0.0
        %v895 = vmax.f32 %v829, 0.0
        %v896 = vpack.c.bf16 %v833, %v832
        %v897 = vpack.c.bf16 %v835, %v834
        %v898 = vpack.c.bf16 %v837, %v836
        %v899 = vpack.c.bf16 %v839, %v838
        %v900 = vpack.c.bf16 %v841, %v840
        %v901 = vpack.c.bf16 %v843, %v842
        %v902 = vpack.c.bf16 %v845, %v844
        %v903 = vpack.c.bf16 %v847, %v846
        %v904 = vpack.c.bf16 %v849, %v848
        %v905 = vpack.c.bf16 %v851, %v850
        %v906 = vpack.c.bf16 %v853, %v852
        %v907 = vpack.c.bf16 %v855, %v854
        %v908 = vpack.c.bf16 %v857, %v856
        %v909 = vpack.c.bf16 %v859, %v858
        %v910 = vpack.c.bf16 %v861, %v860
        %v911 = vpack.c.bf16 %v863, %v862
        %v912 = vpack.c.bf16 %v865, %v864
        %v913 = vpack.c.bf16 %v867, %v866
        %v914 = vpack.c.bf16 %v869, %v868
        %v915 = vpack.c.bf16 %v871, %v870
        %v916 = vpack.c.bf16 %v873, %v872
        %v917 = vpack.c.bf16 %v875, %v874
        %v918 = vpack.c.bf16 %v877, %v876
        %v919 = vpack.c.bf16 %v879, %v878
        %v920 = vpack.c.bf16 %v881, %v880
        %v921 = vpack.c.bf16 %v883, %v882
        %v922 = vpack.c.bf16 %v885, %v884
        %v923 = vpack.c.bf16 %v887, %v886
        %v924 = vpack.c.bf16 %v889, %v888
        %v925 = vpack.c.bf16 %v891, %v890
        %v926 = vpack.c.bf16 %v893, %v892
        %v927 = vpack.c.bf16 %v895, %v894
        %v960 = vunpack.c.l.b16 %v896
        %v961 = vunpack.c.h.b16 %v896
        %v962 = vunpack.c.l.b16 %v897
        %v963 = vunpack.c.h.b16 %v897
        %v964 = vunpack.c.l.b16 %v898
        %v965 = vunpack.c.h.b16 %v898
        %v966 = vunpack.c.l.b16 %v899
        %v967 = vunpack.c.h.b16 %v899
        %v968 = vunpack.c.l.b16 %v900
        %v969 = vunpack.c.h.b16 %v900
        %v970 = vunpack.c.l.b16 %v901
        %v971 = vunpack.c.h.b16 %v901
        %v972 = vunpack.c.l.b16 %v902
        %v973 = vunpack.c.h.b16 %v902
        %v974 = vunpack.c.l.b16 %v903
        %v975 = vunpack.c.h.b16 %v903
        %v976 = vunpack.c.l.b16 %v904
        %v977 = vunpack.c.h.b16 %v904
        %v978 = vunpack.c.l.b16 %v905
        %v979 = vunpack.c.h.b16 %v905
        %v980 = vunpack.c.l.b16 %v906
        %v981 = vunpack.c.h.b16 %v906
        %v982 = vunpack.c.l.b16 %v907
        %v983 = vunpack.c.h.b16 %v907
        %v984 = vunpack.c.l.b16 %v908
        %v985 = vunpack.c.h.b16 %v908
        %v986 = vunpack.c.l.b16 %v909
        %v987 = vunpack.c.h.b16 %v909
        %v988 = vunpack.c.l.b16 %v910
        %v989 = vunpack.c.h.b16 %v910
        %v990 = vunpack.c.l.b16 %v911
        %v991 = vunpack.c.h.b16 %v911
        %v992 = vunpack.c.l.b16 %v912
        %v993 = vunpack.c.h.b16 %v912
        %v994 = vunpack.c.l.b16 %v913
        %v995 = vunpack.c.h.b16 %v913
        %v996 = vunpack.c.l.b16 %v914
        %v997 = vunpack.c.h.b16 %v914
        %v998 = vunpack.c.l.b16 %v915
        %v999 = vunpack.c.h.b16 %v915
        %v1000 = vunpack.c.l.b16 %v916
        %v1001 = vunpack.c.h.b16 %v916
        %v1002 = vunpack.c.l.b16 %v917
        %v1003 = vunpack.c.h.b16 %v917
        %v1004 = vunpack.c.l.b16 %v918
        %v1005 = vunpack.c.h.b16 %v918
        %v1006 = vunpack.c.l.b16 %v919
        %v1007 = vunpack.c.h.b16 %v919
        %v1008 = vunpack.c.l.b16 %v920
        %v1009 = vunpack.c.h.b16 %v920
        %v1010 = vunpack.c.l.b16 %v921
        %v1011 = vunpack.c.h.b16 %v921
        %v1012 = vunpack.c.l.b16 %v922
        %v1013 = vunpack.c.h.b16 %v922
        %v1014 = vunpack.c.l.b16 %v923
        %v1015 = vunpack.c.h.b16 %v923
        %v1016 = vunpack.c.l.b16 %v924
        %v1017 = vunpack.c.h.b16 %v924
        %v1018 = vunpack.c.l.b16 %v925
        %v1019 = vunpack.c.h.b16 %v925
        %v1020 = vunpack.c.l.b16 %v926
        %v1021 = vunpack.c.h.b16 %v926
        %v1022 = vunpack.c.l.b16 %v927
        %v1023 = vunpack.c.h.b16 %v927
        %v1024 = vpack.c.b16 %v960, %v960
        %v1025 = vpack.c.b16 %v961, %v961
        %v1026 = vpack.c.b16 %v962, %v962
        %v1027 = vpack.c.b16 %v963, %v963
        %v1028 = vpack.c.b16 %v964, %v964
        %v1029 = vpack.c.b16 %v965, %v965
        %v1030 = vpack.c.b16 %v966, %v966
        %v1031 = vpack.c.b16 %v967, %v967
        %v1032 = vpack.c.b16 %v968, %v968
        %v1033 = vpack.c.b16 %v969, %v969
        %v1034 = vpack.c.b16 %v970, %v970
        %v1035 = vpack.c.b16 %v971, %v971
        %v1036 = vpack.c.b16 %v972, %v972
        %v1037 = vpack.c.b16 %v973, %v973
        %v1038 = vpack.c.b16 %v974, %v974
        %v1039 = vpack.c.b16 %v975, %v975
        %v1040 = vpack.c.b16 %v976, %v976
        %v1041 = vpack.c.b16 %v977, %v977
        %v1042 = vpack.c.b16 %v978, %v978
        %v1043 = vpack.c.b16 %v979, %v979
        %v1044 = vpack.c.b16 %v980, %v980
        %v1045 = vpack.c.b16 %v981, %v981
        %v1046 = vpack.c.b16 %v982, %v982
        %v1047 = vpack.c.b16 %v983, %v983
        %v1048 = vpack.c.b16 %v984, %v984
        %v1049 = vpack.c.b16 %v985, %v985
        %v1050 = vpack.c.b16 %v986, %v986
        %v1051 = vpack.c.b16 %v987, %v987
        %v1052 = vpack.c.b16 %v988, %v988
        %v1053 = vpack.c.b16 %v989, %v989
        %v1054 = vpack.c.b16 %v990, %v990
        %v1055 = vpack.c.b16 %v991, %v991
        %v1056 = vpack.c.b16 %v992, %v992
        %v1057 = vpack.c.b16 %v993, %v993
        %v1058 = vpack.c.b16 %v994, %v994
        %v1059 = vpack.c.b16 %v995, %v995
        %v1060 = vpack.c.b16 %v996, %v996
        %v1061 = vpack.c.b16 %v997, %v997
        %v1062 = vpack.c.b16 %v998, %v998
        %v1063 = vpack.c.b16 %v999, %v999
        %v1064 = vpack.c.b16 %v1000, %v1000
        %v1065 = vpack.c.b16 %v1001, %v1001
        %v1066 = vpack.c.b16 %v1002, %v1002
        %v1067 = vpack.c.b16 %v1003, %v1003
        %v1068 = vpack.c.b16 %v1004, %v1004
        %v1069 = vpack.c.b16 %v1005, %v1005
        %v1070 = vpack.c.b16 %v1006, %v1006
        %v1071 = vpack.c.b16 %v1007, %v1007
        %v1072 = vpack.c.b16 %v1008, %v1008
        %v1073 = vpack.c.b16 %v1009, %v1009
        %v1074 = vpack.c.b16 %v1010, %v1010
        %v1075 = vpack.c.b16 %v1011, %v1011
        %v1076 = vpack.c.b16 %v1012, %v1012
        %v1077 = vpack.c.b16 %v1013, %v1013
        %v1078 = vpack.c.b16 %v1014, %v1014
        %v1079 = vpack.c.b16 %v1015, %v1015
        %v1080 = vpack.c.b16 %v1016, %v1016
        %v1081 = vpack.c.b16 %v1017, %v1017
        %v1082 = vpack.c.b16 %v1018, %v1018
        %v1083 = vpack.c.b16 %v1019, %v1019
        %v1084 = vpack.c.b16 %v1020, %v1020
        %v1085 = vpack.c.b16 %v1021, %v1021
        %v1086 = vpack.c.b16 %v1022, %v1022
        %v1087 = vpack.c.b16 %v1023, %v1023
        %vm1152 = vcmask 257024
        %1153 = vst.msk [vmem:[%s172] sm:$0xf] %vm1152, %v1024
        %1154 = vst.msk [vmem:[%s172 + $0x4] sm:$0xf] %vm1152, %v1025
        %1155 = vst.msk [vmem:[%s172 + $0x8] sm:$0xf] %vm1152, %v1026
        %1156 = vst.msk [vmem:[%s172 + $0xc] sm:$0xf] %vm1152, %v1027
        %1157 = vst.msk [vmem:[%s172 + $0x10] sm:$0xf] %vm1152, %v1028
        %1158 = vst.msk [vmem:[%s172 + $0x14] sm:$0xf] %vm1152, %v1029
        %1159 = vst.msk [vmem:[%s172 + $0x18] sm:$0xf] %vm1152, %v1030
        %1160 = vst.msk [vmem:[%s172 + $0x1c] sm:$0xf] %vm1152, %v1031
        %1161 = vst.msk [vmem:[%s172 + $0x20] sm:$0xf] %vm1152, %v1032
        %1162 = vst.msk [vmem:[%s172 + $0x24] sm:$0xf] %vm1152, %v1033
        %1163 = vst.msk [vmem:[%s172 + $0x28] sm:$0xf] %vm1152, %v1034
        %1164 = vst.msk [vmem:[%s172 + $0x2c] sm:$0xf] %vm1152, %v1035
        %1165 = vst.msk [vmem:[%s172 + $0x30] sm:$0xf] %vm1152, %v1036
        %1166 = vst.msk [vmem:[%s172 + $0x34] sm:$0xf] %vm1152, %v1037
        %1167 = vst.msk [vmem:[%s172 + $0x38] sm:$0xf] %vm1152, %v1038
        %1168 = vst.msk [vmem:[%s172 + $0x3c] sm:$0xf] %vm1152, %v1039
        %1169 = vst.msk [vmem:[%s172 + $0x40] sm:$0xf] %vm1152, %v1040
        %1170 = vst.msk [vmem:[%s172 + $0x44] sm:$0xf] %vm1152, %v1041
        %1171 = vst.msk [vmem:[%s172 + $0x48] sm:$0xf] %vm1152, %v1042
        %1172 = vst.msk [vmem:[%s172 + $0x4c] sm:$0xf] %vm1152, %v1043
        %1173 = vst.msk [vmem:[%s172 + $0x50] sm:$0xf] %vm1152, %v1044
        %1174 = vst.msk [vmem:[%s172 + $0x54] sm:$0xf] %vm1152, %v1045
        %1175 = vst.msk [vmem:[%s172 + $0x58] sm:$0xf] %vm1152, %v1046
        %1176 = vst.msk [vmem:[%s172 + $0x5c] sm:$0xf] %vm1152, %v1047
        %1177 = vst.msk [vmem:[%s172 + $0x60] sm:$0xf] %vm1152, %v1048
        %1178 = vst.msk [vmem:[%s172 + $0x64] sm:$0xf] %vm1152, %v1049
        %1179 = vst.msk [vmem:[%s172 + $0x68] sm:$0xf] %vm1152, %v1050
        %1180 = vst.msk [vmem:[%s172 + $0x6c] sm:$0xf] %vm1152, %v1051
        %1181 = vst.msk [vmem:[%s172 + $0x70] sm:$0xf] %vm1152, %v1052
        %1182 = vst.msk [vmem:[%s172 + $0x74] sm:$0xf] %vm1152, %v1053
        %1183 = vst.msk [vmem:[%s172 + $0x78] sm:$0xf] %vm1152, %v1054
        %1184 = vst.msk [vmem:[%s172 + $0x7c] sm:$0xf] %vm1152, %v1055
        %1185 = vst.msk [vmem:[%s172 + $0x80] sm:$0xf] %vm1152, %v1056
        %1186 = vst.msk [vmem:[%s172 + $0x84] sm:$0xf] %vm1152, %v1057
        %1187 = vst.msk [vmem:[%s172 + $0x88] sm:$0xf] %vm1152, %v1058
        %1188 = vst.msk [vmem:[%s172 + $0x8c] sm:$0xf] %vm1152, %v1059
        %1189 = vst.msk [vmem:[%s172 + $0x90] sm:$0xf] %vm1152, %v1060
        %1190 = vst.msk [vmem:[%s172 + $0x94] sm:$0xf] %vm1152, %v1061
        %1191 = vst.msk [vmem:[%s172 + $0x98] sm:$0xf] %vm1152, %v1062
        %1192 = vst.msk [vmem:[%s172 + $0x9c] sm:$0xf] %vm1152, %v1063
        %1193 = vst.msk [vmem:[%s172 + $0xa0] sm:$0xf] %vm1152, %v1064
        %1194 = vst.msk [vmem:[%s172 + $0xa4] sm:$0xf] %vm1152, %v1065
        %1195 = vst.msk [vmem:[%s172 + $0xa8] sm:$0xf] %vm1152, %v1066
        %1196 = vst.msk [vmem:[%s172 + $0xac] sm:$0xf] %vm1152, %v1067
        %1197 = vst.msk [vmem:[%s172 + $0xb0] sm:$0xf] %vm1152, %v1068
        %1198 = vst.msk [vmem:[%s172 + $0xb4] sm:$0xf] %vm1152, %v1069
        %1199 = vst.msk [vmem:[%s172 + $0xb8] sm:$0xf] %vm1152, %v1070
        %1200 = vst.msk [vmem:[%s172 + $0xbc] sm:$0xf] %vm1152, %v1071
        %1201 = vst.msk [vmem:[%s172 + $0xc0] sm:$0xf] %vm1152, %v1072
        %1202 = vst.msk [vmem:[%s172 + $0xc4] sm:$0xf] %vm1152, %v1073
        %1203 = vst.msk [vmem:[%s172 + $0xc8] sm:$0xf] %vm1152, %v1074
        %1204 = vst.msk [vmem:[%s172 + $0xcc] sm:$0xf] %vm1152, %v1075
        %1205 = vst.msk [vmem:[%s172 + $0xd0] sm:$0xf] %vm1152, %v1076
        %1206 = vst.msk [vmem:[%s172 + $0xd4] sm:$0xf] %vm1152, %v1077
        %1207 = vst.msk [vmem:[%s172 + $0xd8] sm:$0xf] %vm1152, %v1078
        %1208 = vst.msk [vmem:[%s172 + $0xdc] sm:$0xf] %vm1152, %v1079
        %1209 = vst.msk [vmem:[%s172 + $0xe0] sm:$0xf] %vm1152, %v1080
        %1210 = vst.msk [vmem:[%s172 + $0xe4] sm:$0xf] %vm1152, %v1081
        %1211 = vst.msk [vmem:[%s172 + $0xe8] sm:$0xf] %vm1152, %v1082
        %1212 = vst.msk [vmem:[%s172 + $0xec] sm:$0xf] %vm1152, %v1083
        %1213 = vst.msk [vmem:[%s172 + $0xf0] sm:$0xf] %vm1152, %v1084
        %1214 = vst.msk [vmem:[%s172 + $0xf4] sm:$0xf] %vm1152, %v1085
        %1215 = vst.msk [vmem:[%s172 + $0xf8] sm:$0xf] %vm1152, %v1086
        %1216 = vst.msk [vmem:[%s172 + $0xfc] sm:$0xf] %vm1152, %v1087
        %s1217 = sand.u32 %s90, 1
        %s1218 = sand.u32 %s90, 1
        %s1219 = smul.addr %s1218, 256
        %s1220 = scalar_lea.vmem [#allocation2], %s1219
        // Predicated region
        $region33: #{tpu_custom_call.1} parent=31 // pred_check
          %p1221 = pneg %p100
        $region34: #{tpu_custom_call.1} parent=31 // pred_check_branch
          %1223 = sbr.rel (%p1221) target = $region36
        $region35: #{tpu_custom_call.1} parent=31 // pred_region
          %s1224 = smul.u32 64, %s14
          %s1225 = ssub.s32 5551, %s1224
          %p1226 = scmp.lt.s32.totalorder %s1225, 64
          %s1227 = scalar_select %p1226, %s1225, 64
          %s1228 = smul.u32 64, %s1227
          %p1229 = scmp.ne.s32.totalorder 0, %s1228
          %s1230 = smul.addr %s1224, 4
          %s1231 = scalar_lea.vmem %s3, %s1230
          // Predicated region
          $region37: #{tpu_custom_call.1} parent=35 // pred_check
            %p1232 = pneg %p1229
          $region38: #{tpu_custom_call.1} parent=35 // pred_check_branch
            %1234 = sbr.rel (%p1232) target = $region40
          $region39: #{tpu_custom_call.1} parent=35 // pred_region
            // Predicated region
            $region41: #{tpu_custom_call.1} parent=39 // pred_check
              _
            $region42: #{tpu_custom_call.1} parent=39 // pred_check_branch
              %1236 = sbr.rel target = $region44
            $region43: #{tpu_custom_call.1} parent=39 // pred_region
              // Predicated region
              $region63: #{tpu_custom_call.1} parent=43 // pred_check
                _
              $region64: #{tpu_custom_call.1} parent=43 // pred_check_branch
                %1411 = sbr.rel (0) target = $region66
              $region65: #{tpu_custom_call.1} parent=43 // pred_region
                %s1413 = sshrl.u32 %s1227, 6
                // While loop
                $region67: #{tpu_custom_call.1} parent=65 // loop_pre_header
                  _
                $region68: #{tpu_custom_call.1} parent=65 // loop_header
                  %s1415 = sphi 0, %s1417
                  %p1416 = scmp.ge.s32.totalorder %s1415, %s1413
                  %s1420 = sphi 0, %s1553
                  %s1421 = sphi %s1220, %s1556
                  %s1422 = sphi %s1231, %s1557
                $region69: #{tpu_custom_call.1} parent=65 // loop_header_branch
                  %1419 = sbr.rel (%p1416) target = $region73
                $region70: #{tpu_custom_call.1} parent=65 // loop_body
                  %v1423 = vld [vmem:[%s1421] sm:$0xf]
                  %1424 = vst [vmem:[%s1422] sm:$0xf] %v1423
                  %v1425 = vld [vmem:[%s1421 + $0x4] sm:$0xf]
                  %1426 = vst [vmem:[%s1422 + $0x4] sm:$0xf] %v1425
                  %v1427 = vld [vmem:[%s1421 + $0x8] sm:$0xf]
                  %1428 = vst [vmem:[%s1422 + $0x8] sm:$0xf] %v1427
                  %v1429 = vld [vmem:[%s1421 + $0xc] sm:$0xf]
                  %1430 = vst [vmem:[%s1422 + $0xc] sm:$0xf] %v1429
                  %v1431 = vld [vmem:[%s1421 + $0x10] sm:$0xf]
                  %1432 = vst [vmem:[%s1422 + $0x10] sm:$0xf] %v1431
                  %v1433 = vld [vmem:[%s1421 + $0x14] sm:$0xf]
                  %1434 = vst [vmem:[%s1422 + $0x14] sm:$0xf] %v1433
                  %v1435 = vld [vmem:[%s1421 + $0x18] sm:$0xf]
                  %1436 = vst [vmem:[%s1422 + $0x18] sm:$0xf] %v1435
                  %v1437 = vld [vmem:[%s1421 + $0x1c] sm:$0xf]
                  %1438 = vst [vmem:[%s1422 + $0x1c] sm:$0xf] %v1437
                  %v1439 = vld [vmem:[%s1421 + $0x20] sm:$0xf]
                  %1440 = vst [vmem:[%s1422 + $0x20] sm:$0xf] %v1439
                  %v1441 = vld [vmem:[%s1421 + $0x24] sm:$0xf]
                  %1442 = vst [vmem:[%s1422 + $0x24] sm:$0xf] %v1441
                  %v1443 = vld [vmem:[%s1421 + $0x28] sm:$0xf]
                  %1444 = vst [vmem:[%s1422 + $0x28] sm:$0xf] %v1443
                  %v1445 = vld [vmem:[%s1421 + $0x2c] sm:$0xf]
                  %1446 = vst [vmem:[%s1422 + $0x2c] sm:$0xf] %v1445
                  %v1447 = vld [vmem:[%s1421 + $0x30] sm:$0xf]
                  %1448 = vst [vmem:[%s1422 + $0x30] sm:$0xf] %v1447
                  %v1449 = vld [vmem:[%s1421 + $0x34] sm:$0xf]
                  %1450 = vst [vmem:[%s1422 + $0x34] sm:$0xf] %v1449
                  %v1451 = vld [vmem:[%s1421 + $0x38] sm:$0xf]
                  %1452 = vst [vmem:[%s1422 + $0x38] sm:$0xf] %v1451
                  %v1453 = vld [vmem:[%s1421 + $0x3c] sm:$0xf]
                  %1454 = vst [vmem:[%s1422 + $0x3c] sm:$0xf] %v1453
                  %v1455 = vld [vmem:[%s1421 + $0x40] sm:$0xf]
                  %1456 = vst [vmem:[%s1422 + $0x40] sm:$0xf] %v1455
                  %v1457 = vld [vmem:[%s1421 + $0x44] sm:$0xf]
                  %1458 = vst [vmem:[%s1422 + $0x44] sm:$0xf] %v1457
                  %v1459 = vld [vmem:[%s1421 + $0x48] sm:$0xf]
                  %1460 = vst [vmem:[%s1422 + $0x48] sm:$0xf] %v1459
                  %v1461 = vld [vmem:[%s1421 + $0x4c] sm:$0xf]
                  %1462 = vst [vmem:[%s1422 + $0x4c] sm:$0xf] %v1461
                  %v1463 = vld [vmem:[%s1421 + $0x50] sm:$0xf]
                  %1464 = vst [vmem:[%s1422 + $0x50] sm:$0xf] %v1463
                  %v1465 = vld [vmem:[%s1421 + $0x54] sm:$0xf]
                  %1466 = vst [vmem:[%s1422 + $0x54] sm:$0xf] %v1465
                  %v1467 = vld [vmem:[%s1421 + $0x58] sm:$0xf]
                  %1468 = vst [vmem:[%s1422 + $0x58] sm:$0xf] %v1467
                  %v1469 = vld [vmem:[%s1421 + $0x5c] sm:$0xf]
                  %1470 = vst [vmem:[%s1422 + $0x5c] sm:$0xf] %v1469
                  %v1471 = vld [vmem:[%s1421 + $0x60] sm:$0xf]
                  %1472 = vst [vmem:[%s1422 + $0x60] sm:$0xf] %v1471
                  %v1473 = vld [vmem:[%s1421 + $0x64] sm:$0xf]
                  %1474 = vst [vmem:[%s1422 + $0x64] sm:$0xf] %v1473
                  %v1475 = vld [vmem:[%s1421 + $0x68] sm:$0xf]
                  %1476 = vst [vmem:[%s1422 + $0x68] sm:$0xf] %v1475
                  %v1477 = vld [vmem:[%s1421 + $0x6c] sm:$0xf]
                  %1478 = vst [vmem:[%s1422 + $0x6c] sm:$0xf] %v1477
                  %v1479 = vld [vmem:[%s1421 + $0x70] sm:$0xf]
                  %1480 = vst [vmem:[%s1422 + $0x70] sm:$0xf] %v1479
                  %v1481 = vld [vmem:[%s1421 + $0x74] sm:$0xf]
                  %1482 = vst [vmem:[%s1422 + $0x74] sm:$0xf] %v1481
                  %v1483 = vld [vmem:[%s1421 + $0x78] sm:$0xf]
                  %1484 = vst [vmem:[%s1422 + $0x78] sm:$0xf] %v1483
                  %v1485 = vld [vmem:[%s1421 + $0x7c] sm:$0xf]
                  %1486 = vst [vmem:[%s1422 + $0x7c] sm:$0xf] %v1485
                  %v1487 = vld [vmem:[%s1421 + $0x80] sm:$0xf]
                  %1488 = vst [vmem:[%s1422 + $0x80] sm:$0xf] %v1487
                  %v1489 = vld [vmem:[%s1421 + $0x84] sm:$0xf]
                  %1490 = vst [vmem:[%s1422 + $0x84] sm:$0xf] %v1489
                  %v1491 = vld [vmem:[%s1421 + $0x88] sm:$0xf]
                  %1492 = vst [vmem:[%s1422 + $0x88] sm:$0xf] %v1491
                  %v1493 = vld [vmem:[%s1421 + $0x8c] sm:$0xf]
                  %1494 = vst [vmem:[%s1422 + $0x8c] sm:$0xf] %v1493
                  %v1495 = vld [vmem:[%s1421 + $0x90] sm:$0xf]
                  %1496 = vst [vmem:[%s1422 + $0x90] sm:$0xf] %v1495
                  %v1497 = vld [vmem:[%s1421 + $0x94] sm:$0xf]
                  %1498 = vst [vmem:[%s1422 + $0x94] sm:$0xf] %v1497
                  %v1499 = vld [vmem:[%s1421 + $0x98] sm:$0xf]
                  %1500 = vst [vmem:[%s1422 + $0x98] sm:$0xf] %v1499
                  %v1501 = vld [vmem:[%s1421 + $0x9c] sm:$0xf]
                  %1502 = vst [vmem:[%s1422 + $0x9c] sm:$0xf] %v1501
                  %v1503 = vld [vmem:[%s1421 + $0xa0] sm:$0xf]
                  %1504 = vst [vmem:[%s1422 + $0xa0] sm:$0xf] %v1503
                  %v1505 = vld [vmem:[%s1421 + $0xa4] sm:$0xf]
                  %1506 = vst [vmem:[%s1422 + $0xa4] sm:$0xf] %v1505
                  %v1507 = vld [vmem:[%s1421 + $0xa8] sm:$0xf]
                  %1508 = vst [vmem:[%s1422 + $0xa8] sm:$0xf] %v1507
                  %v1509 = vld [vmem:[%s1421 + $0xac] sm:$0xf]
                  %1510 = vst [vmem:[%s1422 + $0xac] sm:$0xf] %v1509
                  %v1511 = vld [vmem:[%s1421 + $0xb0] sm:$0xf]
                  %1512 = vst [vmem:[%s1422 + $0xb0] sm:$0xf] %v1511
                  %v1513 = vld [vmem:[%s1421 + $0xb4] sm:$0xf]
                  %1514 = vst [vmem:[%s1422 + $0xb4] sm:$0xf] %v1513
                  %v1515 = vld [vmem:[%s1421 + $0xb8] sm:$0xf]
                  %1516 = vst [vmem:[%s1422 + $0xb8] sm:$0xf] %v1515
                  %v1517 = vld [vmem:[%s1421 + $0xbc] sm:$0xf]
                  %1518 = vst [vmem:[%s1422 + $0xbc] sm:$0xf] %v1517
                  %v1519 = vld [vmem:[%s1421 + $0xc0] sm:$0xf]
                  %1520 = vst [vmem:[%s1422 + $0xc0] sm:$0xf] %v1519
                  %v1521 = vld [vmem:[%s1421 + $0xc4] sm:$0xf]
                  %1522 = vst [vmem:[%s1422 + $0xc4] sm:$0xf] %v1521
                  %v1523 = vld [vmem:[%s1421 + $0xc8] sm:$0xf]
                  %1524 = vst [vmem:[%s1422 + $0xc8] sm:$0xf] %v1523
                  %v1525 = vld [vmem:[%s1421 + $0xcc] sm:$0xf]
                  %1526 = vst [vmem:[%s1422 + $0xcc] sm:$0xf] %v1525
                  %v1527 = vld [vmem:[%s1421 + $0xd0] sm:$0xf]
                  %1528 = vst [vmem:[%s1422 + $0xd0] sm:$0xf] %v1527
                  %v1529 = vld [vmem:[%s1421 + $0xd4] sm:$0xf]
                  %1530 = vst [vmem:[%s1422 + $0xd4] sm:$0xf] %v1529
                  %v1531 = vld [vmem:[%s1421 + $0xd8] sm:$0xf]
                  %1532 = vst [vmem:[%s1422 + $0xd8] sm:$0xf] %v1531
                  %v1533 = vld [vmem:[%s1421 + $0xdc] sm:$0xf]
                  %1534 = vst [vmem:[%s1422 + $0xdc] sm:$0xf] %v1533
                  %v1535 = vld [vmem:[%s1421 + $0xe0] sm:$0xf]
                  %1536 = vst [vmem:[%s1422 + $0xe0] sm:$0xf] %v1535
                  %v1537 = vld [vmem:[%s1421 + $0xe4] sm:$0xf]
                  %1538 = vst [vmem:[%s1422 + $0xe4] sm:$0xf] %v1537
                  %v1539 = vld [vmem:[%s1421 + $0xe8] sm:$0xf]
                  %1540 = vst [vmem:[%s1422 + $0xe8] sm:$0xf] %v1539
                  %v1541 = vld [vmem:[%s1421 + $0xec] sm:$0xf]
                  %1542 = vst [vmem:[%s1422 + $0xec] sm:$0xf] %v1541
                  %v1543 = vld [vmem:[%s1421 + $0xf0] sm:$0xf]
                  %1544 = vst [vmem:[%s1422 + $0xf0] sm:$0xf] %v1543
                  %v1545 = vld [vmem:[%s1421 + $0xf4] sm:$0xf]
                  %1546 = vst [vmem:[%s1422 + $0xf4] sm:$0xf] %v1545
                  %v1547 = vld [vmem:[%s1421 + $0xf8] sm:$0xf]
                  %1548 = vst [vmem:[%s1422 + $0xf8] sm:$0xf] %v1547
                  %v1549 = vld [vmem:[%s1421 + $0xfc] sm:$0xf]
                  %1550 = vst [vmem:[%s1422 + $0xfc] sm:$0xf] %v1549
                  %s1551 = sadd.s32 1, %s1420
                  %p1552 = scmp.ge.s32.totalorder %s1551, %s1413
                  %s1553 = scalar_select %p1552, 0, %s1551
                  %s1554 = smul.u32 %s1553, 256
                  %s1555 = smul.u32 %s1553, 256
                  %s1556 = scalar_lea.vmem %s1220, %s1554 [#allocation2]
                  %s1557 = scalar_lea.vmem %s1231, %s1555
                $region71: #{tpu_custom_call.1} parent=65 // loop_footer
                  %s1417 = sadd.s32 %s1415, 1
                $region72: #{tpu_custom_call.1} parent=65 // loop_footer_branch
                  %1414 = sbr.rel target = $region68
                $region73: #{tpu_custom_call.1} parent=65 // loop_exit
                  _
                %s1558 = sshrl.u32 %s1227, 6
                %s1559 = sand.u32 %s1227, 63
                %s1560 = smul.u32 %s1558, 64
                %s1561 = smul.u32 4, %s1560
                %s1562 = scalar_lea.vmem %s1220, %s1561 [#allocation2]
                %s1563 = smul.u32 4, %s1560
                %s1564 = scalar_lea.vmem %s1231, %s1563
                // While loop
                $region74: #{tpu_custom_call.1} parent=65 // loop_pre_header
                  _
                $region75: #{tpu_custom_call.1} parent=65 // loop_header
                  %s1566 = sphi 0, %s1568
                  %p1567 = scmp.ge.s32.totalorder %s1566, %s1559
                  %s1571 = sphi 0, %s1578
                  %s1572 = sphi %s1562, %s1581
                  %s1573 = sphi %s1564, %s1582
                $region76: #{tpu_custom_call.1} parent=65 // loop_header_branch
                  %1570 = sbr.rel (%p1567) target = $region80
                $region77: #{tpu_custom_call.1} parent=65 // loop_body
                  %v1574 = vld [vmem:[%s1572] sm:$0xf]
                  %1575 = vst [vmem:[%s1573] sm:$0xf] %v1574
                  %s1576 = sadd.s32 1, %s1571
                  %p1577 = scmp.ge.s32.totalorder %s1576, %s1559
                  %s1578 = scalar_select %p1577, 0, %s1576
                  %s1579 = smul.u32 %s1578, 4
                  %s1580 = smul.u32 %s1578, 4
                  %s1581 = scalar_lea.vmem %s1562, %s1579 [#allocation2]
                  %s1582 = scalar_lea.vmem %s1564, %s1580
                $region78: #{tpu_custom_call.1} parent=65 // loop_footer
                  %s1568 = sadd.s32 %s1566, 1
                $region79: #{tpu_custom_call.1} parent=65 // loop_footer_branch
                  %1565 = sbr.rel target = $region75
                $region80: #{tpu_custom_call.1} parent=65 // loop_exit
                  _
              $region66: #{tpu_custom_call.1} parent=43 // pred_fallthru
                _
            $region44: #{tpu_custom_call.1} parent=39 // pred_fallthru
              _
            // Predicated region
            $region45: #{tpu_custom_call.1} parent=39 // pred_check
              _
            $region46: #{tpu_custom_call.1} parent=39 // pred_check_branch
              %1238 = sbr.rel (0) target = $region48
            $region47: #{tpu_custom_call.1} parent=39 // pred_region
              %s1240 = sshrl.u32 %s1227, 6
              // While loop
              $region49: #{tpu_custom_call.1} parent=47 // loop_pre_header
                _
              $region50: #{tpu_custom_call.1} parent=47 // loop_header
                %s1242 = sphi 0, %s1244
                %p1243 = scmp.ge.s32.totalorder %s1242, %s1240
                %s1247 = sphi 0, %s1380
                %s1248 = sphi %s1220, %s1383
                %s1249 = sphi %s1231, %s1384
              $region51: #{tpu_custom_call.1} parent=47 // loop_header_branch
                %1246 = sbr.rel (%p1243) target = $region55
              $region52: #{tpu_custom_call.1} parent=47 // loop_body
                %v1250 = vld [vmem:[%s1248] sm:$0xf]
                %1251 = vst [vmem:[%s1249] sm:$0xf] %v1250
                %v1252 = vld [vmem:[%s1248 + $0x4] sm:$0xf]
                %1253 = vst [vmem:[%s1249 + $0x4] sm:$0xf] %v1252
                %v1254 = vld [vmem:[%s1248 + $0x8] sm:$0xf]
                %1255 = vst [vmem:[%s1249 + $0x8] sm:$0xf] %v1254
                %v1256 = vld [vmem:[%s1248 + $0xc] sm:$0xf]
                %1257 = vst [vmem:[%s1249 + $0xc] sm:$0xf] %v1256
                %v1258 = vld [vmem:[%s1248 + $0x10] sm:$0xf]
                %1259 = vst [vmem:[%s1249 + $0x10] sm:$0xf] %v1258
                %v1260 = vld [vmem:[%s1248 + $0x14] sm:$0xf]
                %1261 = vst [vmem:[%s1249 + $0x14] sm:$0xf] %v1260
                %v1262 = vld [vmem:[%s1248 + $0x18] sm:$0xf]
                %1263 = vst [vmem:[%s1249 + $0x18] sm:$0xf] %v1262
                %v1264 = vld [vmem:[%s1248 + $0x1c] sm:$0xf]
                %1265 = vst [vmem:[%s1249 + $0x1c] sm:$0xf] %v1264
                %v1266 = vld [vmem:[%s1248 + $0x20] sm:$0xf]
                %1267 = vst [vmem:[%s1249 + $0x20] sm:$0xf] %v1266
                %v1268 = vld [vmem:[%s1248 + $0x24] sm:$0xf]
                %1269 = vst [vmem:[%s1249 + $0x24] sm:$0xf] %v1268
                %v1270 = vld [vmem:[%s1248 + $0x28] sm:$0xf]
                %1271 = vst [vmem:[%s1249 + $0x28] sm:$0xf] %v1270
                %v1272 = vld [vmem:[%s1248 + $0x2c] sm:$0xf]
                %1273 = vst [vmem:[%s1249 + $0x2c] sm:$0xf] %v1272
                %v1274 = vld [vmem:[%s1248 + $0x30] sm:$0xf]
                %1275 = vst [vmem:[%s1249 + $0x30] sm:$0xf] %v1274
                %v1276 = vld [vmem:[%s1248 + $0x34] sm:$0xf]
                %1277 = vst [vmem:[%s1249 + $0x34] sm:$0xf] %v1276
                %v1278 = vld [vmem:[%s1248 + $0x38] sm:$0xf]
                %1279 = vst [vmem:[%s1249 + $0x38] sm:$0xf] %v1278
                %v1280 = vld [vmem:[%s1248 + $0x3c] sm:$0xf]
                %1281 = vst [vmem:[%s1249 + $0x3c] sm:$0xf] %v1280
                %v1282 = vld [vmem:[%s1248 + $0x40] sm:$0xf]
                %1283 = vst [vmem:[%s1249 + $0x40] sm:$0xf] %v1282
                %v1284 = vld [vmem:[%s1248 + $0x44] sm:$0xf]
                %1285 = vst [vmem:[%s1249 + $0x44] sm:$0xf] %v1284
                %v1286 = vld [vmem:[%s1248 + $0x48] sm:$0xf]
                %1287 = vst [vmem:[%s1249 + $0x48] sm:$0xf] %v1286
                %v1288 = vld [vmem:[%s1248 + $0x4c] sm:$0xf]
                %1289 = vst [vmem:[%s1249 + $0x4c] sm:$0xf] %v1288
                %v1290 = vld [vmem:[%s1248 + $0x50] sm:$0xf]
                %1291 = vst [vmem:[%s1249 + $0x50] sm:$0xf] %v1290
                %v1292 = vld [vmem:[%s1248 + $0x54] sm:$0xf]
                %1293 = vst [vmem:[%s1249 + $0x54] sm:$0xf] %v1292
                %v1294 = vld [vmem:[%s1248 + $0x58] sm:$0xf]
                %1295 = vst [vmem:[%s1249 + $0x58] sm:$0xf] %v1294
                %v1296 = vld [vmem:[%s1248 + $0x5c] sm:$0xf]
                %1297 = vst [vmem:[%s1249 + $0x5c] sm:$0xf] %v1296
                %v1298 = vld [vmem:[%s1248 + $0x60] sm:$0xf]
                %1299 = vst [vmem:[%s1249 + $0x60] sm:$0xf] %v1298
                %v1300 = vld [vmem:[%s1248 + $0x64] sm:$0xf]
                %1301 = vst [vmem:[%s1249 + $0x64] sm:$0xf] %v1300
                %v1302 = vld [vmem:[%s1248 + $0x68] sm:$0xf]
                %1303 = vst [vmem:[%s1249 + $0x68] sm:$0xf] %v1302
                %v1304 = vld [vmem:[%s1248 + $0x6c] sm:$0xf]
                %1305 = vst [vmem:[%s1249 + $0x6c] sm:$0xf] %v1304
                %v1306 = vld [vmem:[%s1248 + $0x70] sm:$0xf]
                %1307 = vst [vmem:[%s1249 + $0x70] sm:$0xf] %v1306
                %v1308 = vld [vmem:[%s1248 + $0x74] sm:$0xf]
                %1309 = vst [vmem:[%s1249 + $0x74] sm:$0xf] %v1308
                %v1310 = vld [vmem:[%s1248 + $0x78] sm:$0xf]
                %1311 = vst [vmem:[%s1249 + $0x78] sm:$0xf] %v1310
                %v1312 = vld [vmem:[%s1248 + $0x7c] sm:$0xf]
                %1313 = vst [vmem:[%s1249 + $0x7c] sm:$0xf] %v1312
                %v1314 = vld [vmem:[%s1248 + $0x80] sm:$0xf]
                %1315 = vst [vmem:[%s1249 + $0x80] sm:$0xf] %v1314
                %v1316 = vld [vmem:[%s1248 + $0x84] sm:$0xf]
                %1317 = vst [vmem:[%s1249 + $0x84] sm:$0xf] %v1316
                %v1318 = vld [vmem:[%s1248 + $0x88] sm:$0xf]
                %1319 = vst [vmem:[%s1249 + $0x88] sm:$0xf] %v1318
                %v1320 = vld [vmem:[%s1248 + $0x8c] sm:$0xf]
                %1321 = vst [vmem:[%s1249 + $0x8c] sm:$0xf] %v1320
                %v1322 = vld [vmem:[%s1248 + $0x90] sm:$0xf]
                %1323 = vst [vmem:[%s1249 + $0x90] sm:$0xf] %v1322
                %v1324 = vld [vmem:[%s1248 + $0x94] sm:$0xf]
                %1325 = vst [vmem:[%s1249 + $0x94] sm:$0xf] %v1324
                %v1326 = vld [vmem:[%s1248 + $0x98] sm:$0xf]
                %1327 = vst [vmem:[%s1249 + $0x98] sm:$0xf] %v1326
                %v1328 = vld [vmem:[%s1248 + $0x9c] sm:$0xf]
                %1329 = vst [vmem:[%s1249 + $0x9c] sm:$0xf] %v1328
                %v1330 = vld [vmem:[%s1248 + $0xa0] sm:$0xf]
                %1331 = vst [vmem:[%s1249 + $0xa0] sm:$0xf] %v1330
                %v1332 = vld [vmem:[%s1248 + $0xa4] sm:$0xf]
                %1333 = vst [vmem:[%s1249 + $0xa4] sm:$0xf] %v1332
                %v1334 = vld [vmem:[%s1248 + $0xa8] sm:$0xf]
                %1335 = vst [vmem:[%s1249 + $0xa8] sm:$0xf] %v1334
                %v1336 = vld [vmem:[%s1248 + $0xac] sm:$0xf]
                %1337 = vst [vmem:[%s1249 + $0xac] sm:$0xf] %v1336
                %v1338 = vld [vmem:[%s1248 + $0xb0] sm:$0xf]
                %1339 = vst [vmem:[%s1249 + $0xb0] sm:$0xf] %v1338
                %v1340 = vld [vmem:[%s1248 + $0xb4] sm:$0xf]
                %1341 = vst [vmem:[%s1249 + $0xb4] sm:$0xf] %v1340
                %v1342 = vld [vmem:[%s1248 + $0xb8] sm:$0xf]
                %1343 = vst [vmem:[%s1249 + $0xb8] sm:$0xf] %v1342
                %v1344 = vld [vmem:[%s1248 + $0xbc] sm:$0xf]
                %1345 = vst [vmem:[%s1249 + $0xbc] sm:$0xf] %v1344
                %v1346 = vld [vmem:[%s1248 + $0xc0] sm:$0xf]
                %1347 = vst [vmem:[%s1249 + $0xc0] sm:$0xf] %v1346
                %v1348 = vld [vmem:[%s1248 + $0xc4] sm:$0xf]
                %1349 = vst [vmem:[%s1249 + $0xc4] sm:$0xf] %v1348
                %v1350 = vld [vmem:[%s1248 + $0xc8] sm:$0xf]
                %1351 = vst [vmem:[%s1249 + $0xc8] sm:$0xf] %v1350
                %v1352 = vld [vmem:[%s1248 + $0xcc] sm:$0xf]
                %1353 = vst [vmem:[%s1249 + $0xcc] sm:$0xf] %v1352
                %v1354 = vld [vmem:[%s1248 + $0xd0] sm:$0xf]
                %1355 = vst [vmem:[%s1249 + $0xd0] sm:$0xf] %v1354
                %v1356 = vld [vmem:[%s1248 + $0xd4] sm:$0xf]
                %1357 = vst [vmem:[%s1249 + $0xd4] sm:$0xf] %v1356
                %v1358 = vld [vmem:[%s1248 + $0xd8] sm:$0xf]
                %1359 = vst [vmem:[%s1249 + $0xd8] sm:$0xf] %v1358
                %v1360 = vld [vmem:[%s1248 + $0xdc] sm:$0xf]
                %1361 = vst [vmem:[%s1249 + $0xdc] sm:$0xf] %v1360
                %v1362 = vld [vmem:[%s1248 + $0xe0] sm:$0xf]
                %1363 = vst [vmem:[%s1249 + $0xe0] sm:$0xf] %v1362
                %v1364 = vld [vmem:[%s1248 + $0xe4] sm:$0xf]
                %1365 = vst [vmem:[%s1249 + $0xe4] sm:$0xf] %v1364
                %v1366 = vld [vmem:[%s1248 + $0xe8] sm:$0xf]
                %1367 = vst [vmem:[%s1249 + $0xe8] sm:$0xf] %v1366
                %v1368 = vld [vmem:[%s1248 + $0xec] sm:$0xf]
                %1369 = vst [vmem:[%s1249 + $0xec] sm:$0xf] %v1368
                %v1370 = vld [vmem:[%s1248 + $0xf0] sm:$0xf]
                %1371 = vst [vmem:[%s1249 + $0xf0] sm:$0xf] %v1370
                %v1372 = vld [vmem:[%s1248 + $0xf4] sm:$0xf]
                %1373 = vst [vmem:[%s1249 + $0xf4] sm:$0xf] %v1372
                %v1374 = vld [vmem:[%s1248 + $0xf8] sm:$0xf]
                %1375 = vst [vmem:[%s1249 + $0xf8] sm:$0xf] %v1374
                %v1376 = vld [vmem:[%s1248 + $0xfc] sm:$0xf]
                %1377 = vst [vmem:[%s1249 + $0xfc] sm:$0xf] %v1376
                %s1378 = sadd.s32 1, %s1247
                %p1379 = scmp.ge.s32.totalorder %s1378, %s1240
                %s1380 = scalar_select %p1379, 0, %s1378
                %s1381 = smul.u32 %s1380, 256
                %s1382 = smul.u32 %s1380, 256
                %s1383 = scalar_lea.vmem %s1220, %s1381 [#allocation2]
                %s1384 = scalar_lea.vmem %s1231, %s1382
              $region53: #{tpu_custom_call.1} parent=47 // loop_footer
                %s1244 = sadd.s32 %s1242, 1
              $region54: #{tpu_custom_call.1} parent=47 // loop_footer_branch
                %1241 = sbr.rel target = $region50
              $region55: #{tpu_custom_call.1} parent=47 // loop_exit
                _
              %s1385 = sshrl.u32 %s1227, 6
              %s1386 = sand.u32 %s1227, 63
              %s1387 = smul.u32 %s1385, 64
              %s1388 = smul.u32 4, %s1387
              %s1389 = scalar_lea.vmem %s1220, %s1388 [#allocation2]
              %s1390 = smul.u32 4, %s1387
              %s1391 = scalar_lea.vmem %s1231, %s1390
              // While loop
              $region56: #{tpu_custom_call.1} parent=47 // loop_pre_header
                _
              $region57: #{tpu_custom_call.1} parent=47 // loop_header
                %s1393 = sphi 0, %s1395
                %p1394 = scmp.ge.s32.totalorder %s1393, %s1386
                %s1398 = sphi 0, %s1405
                %s1399 = sphi %s1389, %s1408
                %s1400 = sphi %s1391, %s1409
              $region58: #{tpu_custom_call.1} parent=47 // loop_header_branch
                %1397 = sbr.rel (%p1394) target = $region62
              $region59: #{tpu_custom_call.1} parent=47 // loop_body
                %v1401 = vld [vmem:[%s1399] sm:$0xf]
                %1402 = vst [vmem:[%s1400] sm:$0xf] %v1401
                %s1403 = sadd.s32 1, %s1398
                %p1404 = scmp.ge.s32.totalorder %s1403, %s1386
                %s1405 = scalar_select %p1404, 0, %s1403
                %s1406 = smul.u32 %s1405, 4
                %s1407 = smul.u32 %s1405, 4
                %s1408 = scalar_lea.vmem %s1389, %s1406 [#allocation2]
                %s1409 = scalar_lea.vmem %s1391, %s1407
              $region60: #{tpu_custom_call.1} parent=47 // loop_footer
                %s1395 = sadd.s32 %s1393, 1
              $region61: #{tpu_custom_call.1} parent=47 // loop_footer_branch
                %1392 = sbr.rel target = $region57
              $region62: #{tpu_custom_call.1} parent=47 // loop_exit
                _
            $region48: #{tpu_custom_call.1} parent=39 // pred_fallthru
              _
          $region40: #{tpu_custom_call.1} parent=35 // pred_fallthru
            _
          %1583 = vnop
        $region36: #{tpu_custom_call.1} parent=31 // pred_fallthru
          _
      $region32: #{tpu_custom_call.1} parent=5 // pred_fallthru
        _
      %p1584 = scmp.le.s32.totalorder 2, %s9
      // Predicated region
      $region81: #{tpu_custom_call.1} parent=5 // pred_check
        %p1585 = pneg %p1584
      $region82: #{tpu_custom_call.1} parent=5 // pred_check_branch
        %1587 = sbr.rel (%p1585) target = $region84
      $region83: #{tpu_custom_call.1} parent=5 // pred_region
        %s1588 = ssub.s32 %s9, 2
        // Predicated region
        $region85: #{tpu_custom_call.1} parent=83 // pred_check
          %p1589 = pneg %p106
        $region86: #{tpu_custom_call.1} parent=83 // pred_check_branch
          %1591 = sbr.rel (%p1589) target = $region88
        $region87: #{tpu_custom_call.1} parent=83 // pred_region
          %s1592 = sand.u32 %s91, 1
          %s1593 = sand.u32 %s91, 1
          %s1594 = smul.addr %s1593, 256
          %s1595 = scalar_lea.vmem [#allocation2], %s1594
        $region88: #{tpu_custom_call.1} parent=83 // pred_fallthru
          _
      $region84: #{tpu_custom_call.1} parent=5 // pred_fallthru
        _
    $region6: #{tpu_custom_call.1} parent=1 // loop_footer
      %s13 = sadd.s32 1, %s9
    $region7: #{tpu_custom_call.1} parent=1 // loop_footer_branch
      %8 = sbr.rel target = $region3
    $region8: #{tpu_custom_call.1} parent=1 // loop_exit
      _

</llo_original>
